<compile_context>
chip_gen: v5e
topology: v5e:2x2
jax: 0.10.0
libtpu: 0.0.40
codegen_flags: <defaults>
</compile_context>

<pallas_src>
import functools

import jax
import jax.numpy as jnp
import numpy as np
from jax.experimental import pallas as pl
from jax.experimental.pallas import tpu as pltpu

LN_EPS = 1e-5  # nn.LayerNorm default


def _round_up(n, m):
    return ((n + m - 1) // m) * m


def _ln_normalize(x):
    """Two-pass LayerNorm normalization (no affine), fp32, per row."""
    mean = jnp.mean(x, axis=-1, keepdims=True)
    xc = x - mean
    var = jnp.mean(xc * xc, axis=-1, keepdims=True)
    return xc * jax.lax.rsqrt(var + LN_EPS)


def squeeze_kernel(x_ref, sum_ref, *, true_hw, hw_tile, ragged):
    """Pass 1: accumulate the spatial sum of LN-normalized x per batch.

    gamma/beta and the division by HW are deferred to the (B, C)-sized wrapper
    epilogue (mean(g*n+b) == g*mean(n)+b), so the hot loop is just the
    normalization + a cross-sublane sum, with zero weight residency.
    """
    t = pl.program_id(1)

    @pl.when(t == 0)
    def _():
        sum_ref[...] = jnp.zeros_like(sum_ref)

    x = x_ref[0].astype(jnp.float32)                       # (Th, C)
    norm = _ln_normalize(x)
    if ragged:
        # Only emitted when the last HW tile reads past the end of the array
        # (out-of-bounds rows hold unspecified data and must not pollute the sum).
        row = t * hw_tile + jax.lax.broadcasted_iota(jnp.int32, norm.shape, 0)
        norm = jnp.where(row < true_hw, norm, 0.0)
    sum_ref[0] += jnp.sum(norm, axis=0, keepdims=True)     # (1, C)


def apply_kernel(x_ref, gate_ref, lng_ref, lnb_ref,
                 wd_ref, bd_ref, wu_ref, bu_ref, out_ref, *, scale):
    """Pass 2: out = (LN(x)*gate + up(relu(down(LN(x))))) * scale + x."""
    x = x_ref[0].astype(jnp.float32)                       # (Th, C) residual
    xln = _ln_normalize(x) * lng_ref[...] + lnb_ref[...]

    # Bottleneck adapter on the MXU, fp32 operands (exact vs the fp32
    # reference); the matmuls are fully hidden under the HBM stream.
    h = jnp.dot(xln, wd_ref[...], preferred_element_type=jnp.float32) + bd_ref[...]
    h = jnp.maximum(h, 0.0)                                # (Th, Dp)
    res = jnp.dot(h, wu_ref[...], preferred_element_type=jnp.float32) + bu_ref[...]

    # Fused: up = xln * gate ; out = (up + res) * scale + residual
    out_ref[0] = ((xln * gate_ref[0] + res) * scale + x).astype(out_ref.dtype)


def se_adapter(x, params, *, scale=1.0, hw_tile_bytes=4 << 20):
    """x: (B, H, W, C) -> (B, H, W, C).  Matches SEAdapter.forward defaults
    (adapter_layernorm_option='in', add_residual=True, residual=x)."""
    B, H, W, C = x.shape
    HW = H * W
    D = params["w_down"].shape[1]

    # Only the tiny bottleneck dim of the adapter weights is zero-padded (so the
    # MXU contraction is 128-wide); zero rows/cols keep the math exact.  The
    # feature map itself is never padded or re-typed in HBM.
    Dp = _round_up(D, 128)

    # HW tile: multiple of 8, ~hw_tile_bytes of fp32 working set per tile
    # (>= 512 rows for C <= 2048, past the measured HBM-roofline knee).
    th_cap = max(8, (hw_tile_bytes // (4 * C)) // 8 * 8)
    th = int(min(th_cap, _round_up(HW, 8)))
    n_hw = pl.cdiv(HW, th)
    ragged = (HW % th) != 0

    x3 = x.reshape(B, HW, C)                               # pure reshape, no copy

    f32 = lambda a: a.astype(jnp.float32)
    lng, lnb = f32(params["ln_g"]), f32(params["ln_b"])            # (1, C)
    wd = jnp.pad(f32(params["w_down"]), ((0, 0), (0, Dp - D)))     # (C, Dp)
    bd = jnp.pad(f32(params["b_down"]), ((0, 0), (0, Dp - D)))     # (1, Dp)
    wu = jnp.pad(f32(params["w_up"]), ((0, Dp - D), (0, 0)))       # (Dp, C)
    bu = f32(params["b_up"])                                       # (1, C)

    # Generation-aware VMEM allowance with headroom: 48 MiB on v7x (64 MiB
    # physical), 96 MiB on v5e/v6e (128 MiB physical).
    try:
        vmem_cap = int(pltpu.get_tpu_info().vmem_capacity_bytes)
    except Exception:  # conservative fallback
        vmem_cap = 64 * 2**20
    vmem_limit = (vmem_cap * 3) // 4

    def rep(shape):
        zeros = (0,) * len(shape)
        return pl.BlockSpec(shape, lambda b, t, _z=zeros: _z)

    in_bytes = x.dtype.itemsize

    # ---------------- pass 1: per-batch spatial sum of LN-normalized x ----------
    p1_cost = pl.CostEstimate(
        flops=int(B * HW * C * 6),
        transcendentals=int(B * HW),
        bytes_accessed=int(B * HW * C * in_bytes + B * C * 4))

    ln_sum = pl.pallas_call(
        functools.partial(squeeze_kernel, true_hw=HW, hw_tile=th, ragged=ragged),
        out_shape=jax.ShapeDtypeStruct((B, 1, C), jnp.float32),
        grid_spec=pltpu.PrefetchScalarGridSpec(
            num_scalar_prefetch=0,
            grid=(B, n_hw),
            in_specs=[pl.BlockSpec((1, th, C), lambda b, t: (b, t, 0))],
            out_specs=pl.BlockSpec((1, 1, C), lambda b, t: (b, 0, 0)),
        ),
        compiler_params=pltpu.CompilerParams(
            dimension_semantics=("parallel", "arbitrary"),
            vmem_limit_bytes=vmem_limit),
        cost_estimate=p1_cost,
    )(x3)

    # ------- squeeze affine + excitation MLP: (B, C)-sized, plain XLA -----------
    sq = ln_sum[:, 0, :] * (1.0 / HW) * params["ln_g"] + params["ln_b"]    # (B, C)
    e = jnp.maximum(sq @ params["w_e1"] + params["b_e1"], 0.0)             # (B, D)
    gate = jax.nn.sigmoid(e @ params["w_e2"] + params["b_e2"])             # (B, C)
    gate3 = gate.astype(jnp.float32)[:, None, :]                           # (B, 1, C)

    # ---------------- pass 2: gating + bottleneck adapter + residual ------------
    p2_cost = pl.CostEstimate(
        flops=int(B * HW * (4 * C * Dp + 14 * C)),
        transcendentals=int(B * HW),
        bytes_accessed=int(2 * B * HW * C * in_bytes + 2 * C * Dp * 4 + B * C * 4))

    out = pl.pallas_call(
        functools.partial(apply_kernel, scale=float(scale)),
        out_shape=jax.ShapeDtypeStruct((B, HW, C), x.dtype),
        grid_spec=pltpu.PrefetchScalarGridSpec(
            num_scalar_prefetch=0,
            grid=(B, n_hw),
            in_specs=[
                pl.BlockSpec((1, th, C), lambda b, t: (b, t, 0)),   # x tile
                pl.BlockSpec((1, 1, C), lambda b, t: (b, 0, 0)),    # per-batch gate
                rep((1, C)), rep((1, C)),                           # LN gamma, beta
                rep((C, Dp)), rep((1, Dp)),                         # down_proj W, b
                rep((Dp, C)), rep((1, C)),                          # up_proj   W, b
            ],
            out_specs=pl.BlockSpec((1, th, C), lambda b, t: (b, t, 0)),
        ),
        compiler_params=pltpu.CompilerParams(
            dimension_semantics=("parallel", "parallel"),
            vmem_limit_bytes=vmem_limit),
        cost_estimate=p2_cost,
    )(x3, gate3, lng, lnb, wd, bd, wu, bu)

    return out.reshape(B, H, W, C)


def se_adapter_ref(x, params, scale=1.0):
    """Pure-JAX fp32 reference mirroring the PyTorch forward."""
    mean = jnp.mean(x, axis=-1, keepdims=True)
    var = jnp.mean((x - mean) ** 2, axis=-1, keepdims=True)
    xln = (x - mean) / jnp.sqrt(var + LN_EPS) * params["ln_g"][0] + params["ln_b"][0]
    sq = jnp.mean(xln, axis=(1, 2))                                   # (B, C)
    e = jnp.maximum(sq @ params["w_e1"] + params["b_e1"][0], 0.0)
    e = jax.nn.sigmoid(e @ params["w_e2"] + params["b_e2"][0])        # (B, C)
    up = xln * e[:, None, None, :]
    h = jnp.maximum(xln @ params["w_down"] + params["b_down"][0], 0.0)
    res = h @ params["w_up"] + params["b_up"][0]
    return (up + res) * scale + x


def make_params(key, n_embd, bottleneck):
    # Deterministic synthetic init.  Shapes follow the PyTorch module:
    #   LayerNorm(n_embd), Linear(n_embd, bottleneck), Linear(bottleneck, n_embd),
    #   excitation: Linear(n_embd, bottleneck), Linear(bottleneck, n_embd).
    # NOTE: torch's _init_weights zeros up_proj.weight and all biases; we use
    # small random weights (and non-trivial gamma/beta) so every code path is
    # exercised numerically.
    ks = jax.random.split(key, 10)
    u = lambda k, shape, bound: jax.random.uniform(k, shape, jnp.float32, -bound, bound)
    C, D = n_embd, bottleneck
    return {
        "ln_g":   1.0 + u(ks[8], (1, C), 0.2),
        "ln_b":   u(ks[9], (1, C), 0.2),
        "w_down": u(ks[0], (C, D), 1.0 / np.sqrt(C)),
        "b_down": u(ks[1], (1, D), 1.0 / np.sqrt(C)),
        "w_up":   u(ks[2], (D, C), 1.0 / np.sqrt(D)),
        "b_up":   u(ks[3], (1, C), 1.0 / np.sqrt(D)),
        "w_e1":   u(ks[4], (C, D), 1.0 / np.sqrt(C)),
        "b_e1":   u(ks[5], (1, D), 1.0 / np.sqrt(C)),
        "w_e2":   u(ks[6], (D, C), 1.0 / np.sqrt(D)),
        "b_e2":   u(ks[7], (1, C), 1.0 / np.sqrt(D)),
    }


if __name__ == "__main__":
    B, H, W, C, D = 2, 16, 16, 32, 8   # n_embd=32, bottleneck=8
    key = jax.random.PRNGKey(0)
    kx, kp = jax.random.split(key)
    x = jax.random.normal(kx, (B, H, W, C), jnp.float32)
    params = make_params(kp, C, D)

    fn = jax.jit(functools.partial(se_adapter, scale=1.0))   # adapter_scalar='1.0'
    out = jax.block_until_ready(fn(x, params))

    ref = se_adapter_ref(x, params, scale=1.0)
    # fp32 operands throughout; conservative tolerance covers MXU dot rounding.
    np.testing.assert_allclose(np.asarray(out), np.asarray(ref), rtol=2e-2, atol=2e-2)

    print("KERNEL_OK")
</pallas_src>

<mosaic_0001>
module attributes {stable_mosaic.version = 11 : i64} {
  func.func @squeeze_kernel(%arg0: i32, %arg1: i32, %arg2: memref<1x256x32xf32, #tpu.memory_space<vmem>>, %arg3: memref<1x1x32xf32, #tpu.memory_space<vmem>>) attributes {dimension_semantics = [#tpu.dimension_semantics<parallel>, #tpu.dimension_semantics<arbitrary>], iteration_bounds = array<i64: 2, 1>, scalar_prefetch = 0 : i64, scratch_operands = 0 : i64, tpu.core_type = #tpu.core_type<tc>, window_params = [{transform_indices = @transform_0, window_bounds = array<i64: 1, 256, 32>}, {transform_indices = @transform_1, window_bounds = array<i64: 1, 1, 32>}]} {
    %c0_i32 = arith.constant 0 : i32
    %0 = arith.cmpi eq, %arg1, %c0_i32 : i32
    %1 = arith.extui %0 : i1 to i32
    %c0_i32_0 = arith.constant 0 : i32
    %2 = arith.cmpi ne, %1, %c0_i32_0 : i32
    scf.if %2 {
      %cst_14 = arith.constant 0.000000e+00 : f32
      %29 = vector.broadcast %cst_14 : f32 to vector<1x1x32xf32>
      %c0_15 = arith.constant 0 : index
      %c0_16 = arith.constant 0 : index
      %c0_17 = arith.constant 0 : index
      %30 = vector.load %arg3[%c0_15, %c0_16, %c0_17] : memref<1x1x32xf32, #tpu.memory_space<vmem>>, vector<1x1x32xf32>
      tpu.vector_store %arg3[%c0_15, %c0_16, %c0_17], %29 {strides = array<i32>} : memref<1x1x32xf32, #tpu.memory_space<vmem>>, vector<1x1x32xf32>,
    } else {
    }
    %c0 = arith.constant 0 : index
    %c0_1 = arith.constant 0 : index
    %c0_2 = arith.constant 0 : index
    %3 = vector.load %arg2[%c0, %c0_1, %c0_2] : memref<1x256x32xf32, #tpu.memory_space<vmem>>, vector<1x256x32xf32>
    %4 = vector.shape_cast %3 : vector<1x256x32xf32> to vector<256x32xf32>
    %cst = arith.constant dense<0.000000e+00> : vector<256xf32>
    %5 = vector.multi_reduction <add>, %4, %cst [1] : vector<256x32xf32> to vector<256xf32>
    %6 = vector.shape_cast %5 : vector<256xf32> to vector<256x1xf32>
    %cst_3 = arith.constant 3.200000e+01 : f32
    %7 = vector.broadcast %cst_3 : f32 to vector<256x1xf32>
    %8 = arith.divf %6, %7 : vector<256x1xf32>
    %9 = vector.broadcast %8 : vector<256x1xf32> to vector<256x32xf32>
    %10 = arith.subf %4, %9 : vector<256x32xf32>
    %11 = arith.mulf %10, %10 : vector<256x32xf32>
    %cst_4 = arith.constant dense<0.000000e+00> : vector<256xf32>
    %12 = vector.multi_reduction <add>, %11, %cst_4 [1] : vector<256x32xf32> to vector<256xf32>
    %13 = vector.shape_cast %12 : vector<256xf32> to vector<256x1xf32>
    %cst_5 = arith.constant 3.200000e+01 : f32
    %14 = vector.broadcast %cst_5 : f32 to vector<256x1xf32>
    %15 = arith.divf %13, %14 : vector<256x1xf32>
    %cst_6 = arith.constant 9.99999974E-6 : f32
    %16 = vector.broadcast %cst_6 : f32 to vector<256x1xf32>
    %17 = arith.addf %15, %16 : vector<256x1xf32>
    %18 = math.rsqrt %17 : vector<256x1xf32>
    %19 = vector.broadcast %18 : vector<256x1xf32> to vector<256x32xf32>
    %20 = arith.mulf %10, %19 : vector<256x32xf32>
    %c0_7 = arith.constant 0 : index
    %c0_8 = arith.constant 0 : index
    %c0_9 = arith.constant 0 : index
    %21 = vector.load %arg3[%c0_7, %c0_8, %c0_9] : memref<1x1x32xf32, #tpu.memory_space<vmem>>, vector<1x1x32xf32>
    %22 = vector.shape_cast %21 : vector<1x1x32xf32> to vector<1x32xf32>
    %cst_10 = arith.constant dense<0.000000e+00> : vector<32xf32>
    %23 = vector.multi_reduction <add>, %20, %cst_10 [0] : vector<256x32xf32> to vector<32xf32>
    %24 = vector.shape_cast %23 : vector<32xf32> to vector<1x32xf32>
    %25 = arith.addf %22, %24 : vector<1x32xf32>
    %c0_11 = arith.constant 0 : index
    %c0_12 = arith.constant 0 : index
    %c0_13 = arith.constant 0 : index
    %26 = vector.load %arg3[%c0_11, %c0_12, %c0_13] : memref<1x1x32xf32, #tpu.memory_space<vmem>>, vector<1x1x32xf32>
    %27 = vector.shape_cast %26 : vector<1x1x32xf32> to vector<1x32xf32>
    %28 = vector.shape_cast %25 : vector<1x32xf32> to vector<1x1x32xf32>
    tpu.vector_store %arg3[%c0_11, %c0_12, %c0_13], %28 {strides = array<i32>} : memref<1x1x32xf32, #tpu.memory_space<vmem>>, vector<1x1x32xf32>,
    return
  }
  func.func @transform_0(%arg0: i32, %arg1: i32) -> (i32, i32, i32) {
    %c0_i32 = arith.constant 0 : i32
    %c0_i32_0 = arith.constant 0 : i32
    return %arg0, %arg1, %c0_i32 : i32, i32, i32
  }
  func.func @transform_1(%arg0: i32, %arg1: i32) -> (i32, i32, i32) {
    %c0_i32 = arith.constant 0 : i32
    %c0_i32_0 = arith.constant 0 : i32
    %c0_i32_1 = arith.constant 0 : i32
    return %arg0, %c0_i32, %c0_i32_0 : i32, i32, i32
  }
}

module attributes {stable_mosaic.version = 11 : i64} {
  func.func @apply_kernel(%arg0: i32, %arg1: i32, %arg2: memref<1x256x32xf32, #tpu.memory_space<vmem>>, %arg3: memref<1x1x32xf32, #tpu.memory_space<vmem>>, %arg4: memref<1x32xf32, #tpu.memory_space<vmem>>, %arg5: memref<1x32xf32, #tpu.memory_space<vmem>>, %arg6: memref<32x128xf32, #tpu.memory_space<vmem>>, %arg7: memref<1x128xf32, #tpu.memory_space<vmem>>, %arg8: memref<128x32xf32, #tpu.memory_space<vmem>>, %arg9: memref<1x32xf32, #tpu.memory_space<vmem>>, %arg10: memref<1x256x32xf32, #tpu.memory_space<vmem>>) attributes {dimension_semantics = [#tpu.dimension_semantics<parallel>, #tpu.dimension_semantics<parallel>], iteration_bounds = array<i64: 2, 1>, scalar_prefetch = 0 : i64, scratch_operands = 0 : i64, tpu.core_type = #tpu.core_type<tc>, window_params = [{transform_indices = @transform_0, window_bounds = array<i64: 1, 256, 32>}, {transform_indices = @transform_1, window_bounds = array<i64: 1, 1, 32>}, {pipeline_mode = #tpu.pipeline_mode<synchronous>, transform_indices = @transform_2, window_bounds = array<i64: 1, 32>}, {pipeline_mode = #tpu.pipeline_mode<synchronous>, transform_indices = @transform_3, window_bounds = array<i64: 1, 32>}, {pipeline_mode = #tpu.pipeline_mode<synchronous>, transform_indices = @transform_4, window_bounds = array<i64: 32, 128>}, {pipeline_mode = #tpu.pipeline_mode<synchronous>, transform_indices = @transform_5, window_bounds = array<i64: 1, 128>}, {pipeline_mode = #tpu.pipeline_mode<synchronous>, transform_indices = @transform_6, window_bounds = array<i64: 128, 32>}, {pipeline_mode = #tpu.pipeline_mode<synchronous>, transform_indices = @transform_7, window_bounds = array<i64: 1, 32>}, {transform_indices = @transform_8, window_bounds = array<i64: 1, 256, 32>}]} {
    %c0 = arith.constant 0 : index
    %c0_0 = arith.constant 0 : index
    %c0_1 = arith.constant 0 : index
    %0 = vector.load %arg2[%c0, %c0_0, %c0_1] : memref<1x256x32xf32, #tpu.memory_space<vmem>>, vector<1x256x32xf32>
    %1 = vector.shape_cast %0 : vector<1x256x32xf32> to vector<256x32xf32>
    %cst = arith.constant dense<0.000000e+00> : vector<256xf32>
    %2 = vector.multi_reduction <add>, %1, %cst [1] : vector<256x32xf32> to vector<256xf32>
    %3 = vector.shape_cast %2 : vector<256xf32> to vector<256x1xf32>
    %cst_2 = arith.constant 3.200000e+01 : f32
    %4 = vector.broadcast %cst_2 : f32 to vector<256x1xf32>
    %5 = arith.divf %3, %4 : vector<256x1xf32>
    %6 = vector.broadcast %5 : vector<256x1xf32> to vector<256x32xf32>
    %7 = arith.subf %1, %6 : vector<256x32xf32>
    %8 = arith.mulf %7, %7 : vector<256x32xf32>
    %cst_3 = arith.constant dense<0.000000e+00> : vector<256xf32>
    %9 = vector.multi_reduction <add>, %8, %cst_3 [1] : vector<256x32xf32> to vector<256xf32>
    %10 = vector.shape_cast %9 : vector<256xf32> to vector<256x1xf32>
    %cst_4 = arith.constant 3.200000e+01 : f32
    %11 = vector.broadcast %cst_4 : f32 to vector<256x1xf32>
    %12 = arith.divf %10, %11 : vector<256x1xf32>
    %cst_5 = arith.constant 9.99999974E-6 : f32
    %13 = vector.broadcast %cst_5 : f32 to vector<256x1xf32>
    %14 = arith.addf %12, %13 : vector<256x1xf32>
    %15 = math.rsqrt %14 : vector<256x1xf32>
    %16 = vector.broadcast %15 : vector<256x1xf32> to vector<256x32xf32>
    %17 = arith.mulf %7, %16 : vector<256x32xf32>
    %c0_6 = arith.constant 0 : index
    %c0_7 = arith.constant 0 : index
    %18 = vector.load %arg4[%c0_6, %c0_7] : memref<1x32xf32, #tpu.memory_space<vmem>>, vector<1x32xf32>
    %19 = vector.broadcast %18 : vector<1x32xf32> to vector<256x32xf32>
    %20 = arith.mulf %17, %19 : vector<256x32xf32>
    %c0_8 = arith.constant 0 : index
    %c0_9 = arith.constant 0 : index
    %21 = vector.load %arg5[%c0_8, %c0_9] : memref<1x32xf32, #tpu.memory_space<vmem>>, vector<1x32xf32>
    %22 = vector.broadcast %21 : vector<1x32xf32> to vector<256x32xf32>
    %23 = arith.addf %20, %22 : vector<256x32xf32>
    %c0_10 = arith.constant 0 : index
    %c0_11 = arith.constant 0 : index
    %24 = vector.load %arg6[%c0_10, %c0_11] : memref<32x128xf32, #tpu.memory_space<vmem>>, vector<32x128xf32>
    %cst_12 = arith.constant dense<0.000000e+00> : vector<256x128xf32>
    %25 = tpu.matmul %23, %24, %cst_12 {dimension_numbers = #tpu.dot_dimension_numbers<[1], [0], [0], [1], [0, 0, 1, 1], [], []>} : vector<256x32xf32>, vector<32x128xf32>, vector<256x128xf32> -> vector<256x128xf32>
    %c0_13 = arith.constant 0 : index
    %c0_14 = arith.constant 0 : index
    %26 = vector.load %arg7[%c0_13, %c0_14] : memref<1x128xf32, #tpu.memory_space<vmem>>, vector<1x128xf32>
    %27 = vector.broadcast %26 : vector<1x128xf32> to vector<256x128xf32>
    %28 = arith.addf %25, %27 : vector<256x128xf32>
    %cst_15 = arith.constant 0.000000e+00 : f32
    %29 = vector.broadcast %cst_15 : f32 to vector<256x128xf32>
    %30 = arith.maximumf %28, %29 : vector<256x128xf32>
    %c0_16 = arith.constant 0 : index
    %c0_17 = arith.constant 0 : index
    %31 = vector.load %arg8[%c0_16, %c0_17] : memref<128x32xf32, #tpu.memory_space<vmem>>, vector<128x32xf32>
    %cst_18 = arith.constant dense<0.000000e+00> : vector<256x32xf32>
    %32 = tpu.matmul %30, %31, %cst_18 {dimension_numbers = #tpu.dot_dimension_numbers<[1], [0], [0], [1], [0, 0, 1, 1], [], []>} : vector<256x128xf32>, vector<128x32xf32>, vector<256x32xf32> -> vector<256x32xf32>
    %c0_19 = arith.constant 0 : index
    %c0_20 = arith.constant 0 : index
    %33 = vector.load %arg9[%c0_19, %c0_20] : memref<1x32xf32, #tpu.memory_space<vmem>>, vector<1x32xf32>
    %34 = vector.broadcast %33 : vector<1x32xf32> to vector<256x32xf32>
    %35 = arith.addf %32, %34 : vector<256x32xf32>
    %c0_21 = arith.constant 0 : index
    %c0_22 = arith.constant 0 : index
    %c0_23 = arith.constant 0 : index
    %36 = vector.load %arg3[%c0_21, %c0_22, %c0_23] : memref<1x1x32xf32, #tpu.memory_space<vmem>>, vector<1x1x32xf32>
    %37 = vector.shape_cast %36 : vector<1x1x32xf32> to vector<1x32xf32>
    %38 = vector.broadcast %37 : vector<1x32xf32> to vector<256x32xf32>
    %39 = arith.mulf %23, %38 : vector<256x32xf32>
    %40 = arith.addf %39, %35 : vector<256x32xf32>
    %cst_24 = arith.constant 1.000000e+00 : f32
    %41 = vector.broadcast %cst_24 : f32 to vector<256x32xf32>
    %42 = arith.mulf %40, %41 : vector<256x32xf32>
    %43 = arith.addf %42, %1 : vector<256x32xf32>
    %c0_25 = arith.constant 0 : index
    %c0_26 = arith.constant 0 : index
    %c0_27 = arith.constant 0 : index
    %44 = vector.load %arg10[%c0_25, %c0_26, %c0_27] : memref<1x256x32xf32, #tpu.memory_space<vmem>>, vector<1x256x32xf32>
    %45 = vector.shape_cast %44 : vector<1x256x32xf32> to vector<256x32xf32>
    %46 = vector.shape_cast %43 : vector<256x32xf32> to vector<1x256x32xf32>
    tpu.vector_store %arg10[%c0_25, %c0_26, %c0_27], %46 {strides = array<i32>} : memref<1x256x32xf32, #tpu.memory_space<vmem>>, vector<1x256x32xf32>,
    return
  }
  func.func @transform_0(%arg0: i32, %arg1: i32) -> (i32, i32, i32) {
    %c0_i32 = arith.constant 0 : i32
    %c0_i32_0 = arith.constant 0 : i32
    return %arg0, %arg1, %c0_i32 : i32, i32, i32
  }
  func.func @transform_1(%arg0: i32, %arg1: i32) -> (i32, i32, i32) {
    %c0_i32 = arith.constant 0 : i32
    %c0_i32_0 = arith.constant 0 : i32
    %c0_i32_1 = arith.constant 0 : i32
    return %arg0, %c0_i32, %c0_i32_0 : i32, i32, i32
  }
  func.func @transform_2(%arg0: i32, %arg1: i32) -> (i32, i32) {
    %c0_i32 = arith.constant 0 : i32
    %c0_i32_0 = arith.constant 0 : i32
    %c0_i32_1 = arith.constant 0 : i32
    return %c0_i32, %c0_i32_0 : i32, i32
  }
  func.func @transform_3(%arg0: i32, %arg1: i32) -> (i32, i32) {
    %c0_i32 = arith.constant 0 : i32
    %c0_i32_0 = arith.constant 0 : i32
    %c0_i32_1 = arith.constant 0 : i32
    return %c0_i32, %c0_i32_0 : i32, i32
  }
  func.func @transform_4(%arg0: i32, %arg1: i32) -> (i32, i32) {
    %c0_i32 = arith.constant 0 : i32
    %c0_i32_0 = arith.constant 0 : i32
    %c0_i32_1 = arith.constant 0 : i32
    return %c0_i32, %c0_i32_0 : i32, i32
  }
  func.func @transform_5(%arg0: i32, %arg1: i32) -> (i32, i32) {
    %c0_i32 = arith.constant 0 : i32
    %c0_i32_0 = arith.constant 0 : i32
    %c0_i32_1 = arith.constant 0 : i32
    return %c0_i32, %c0_i32_0 : i32, i32
  }
  func.func @transform_6(%arg0: i32, %arg1: i32) -> (i32, i32) {
    %c0_i32 = arith.constant 0 : i32
    %c0_i32_0 = arith.constant 0 : i32
    %c0_i32_1 = arith.constant 0 : i32
    return %c0_i32, %c0_i32_0 : i32, i32
  }
  func.func @transform_7(%arg0: i32, %arg1: i32) -> (i32, i32) {
    %c0_i32 = arith.constant 0 : i32
    %c0_i32_0 = arith.constant 0 : i32
    %c0_i32_1 = arith.constant 0 : i32
    return %c0_i32, %c0_i32_0 : i32, i32
  }
  func.func @transform_8(%arg0: i32, %arg1: i32) -> (i32, i32, i32) {
    %c0_i32 = arith.constant 0 : i32
    %c0_i32_0 = arith.constant 0 : i32
    return %arg0, %arg1, %c0_i32 : i32, i32, i32
  }
}

</mosaic_0001>

<llo_original>
// kernel: se_adapter.2
$region0: #{se_adapter.2}
  #allocation0 [shape = 'u32[]', space=smem, size = 0x4, offset = 0x4, fixed_abs, tag = 'smem constant byte address 0x4 - core index']
  #allocation1 [shape = 'u32[72,128]{1,0:T(1,128)}', space=vmem, size = 0x9000, scoped, tag = 'internal scratch']
  %s0 = inlined_call_operand.hbm [shape: f32[2,256,32], index: 0, kind: input, shape index: {}]
  %s1 = inlined_call_operand.vmem [shape: f32[2,1,32], index: 1, kind: output, shape index: {}]
  %s2 = sld [smem:[#allocation0]]
  $region45: #{se_adapter.2} parent=0
    _
  %s4 = ssub.s32 1, %s2
  %s5 = scalar_select 0, %s4, %s2
  $region1: #{se_adapter.2} parent=0
    #allocation2 [shape = 'u8[262144]{0}', space=vmem, size = 0x40000, scoped, tag = 'input window, operand 0']
    #allocation3 [shape = 's32[2]{0}', space=sflag, size = 0x8, scoped, tag = 'scoped memory for se_adapter.2']
    %6 = vsyncpa [#allocation3], 0
    %s7 = scalar_lea.sflag [#allocation3], 1
    %8 = vsyncpa %s7, 0
    loop: start=0, step=1, limit=4
    $region2: #{se_adapter.2} parent=1 // loop_pre_header
      _
    $region3: #{se_adapter.2} parent=1 // loop_header
      %s10 = sphi 0, %s14
      %p11 = scmp.ge.s32.totalorder %s10, 4
      %s17 = sphi 0, %s29
      %s18 = sphi 0, %s25
      %s19 = sphi 0, %s17
      %s20 = sphi 0, %s18
      %s21 = sphi 0, %s19
      %s22 = sphi 0, %s20
      %s34 = sphi 0, %s36
      %s37 = sphi 0, %s34
      %s38 = sphi 0, %s37
      %s54 = sphi 0, %s38
      %s60 = sphi 0, %s62
      %s63 = sphi 0, %s60
      %s64 = sphi 0, %s63
      %s80 = sphi 0, %s64
    $region4: #{se_adapter.2} parent=1 // loop_header_branch
      %13 = sbr.rel (%p11) target = $region8
    $region5: #{se_adapter.2} parent=1 // loop_body
      %s15 = ssub.s32 %s10, 1
      %s16 = ssub.s32 %s10, 2
      %s23 = sadd.s32 1, %s18
      %p24 = scmp.ge.s32.totalorder %s23, 1
      %s25 = scalar_select %p24, 0, %s23
      %s26 = sadd.s32 1, %s17
      %s27 = scalar_select %p24, %s26, %s17
      %p28 = scmp.ge.s32.totalorder %s27, 2
      %s29 = scalar_select %p28, 0, %s27
      %s30 = ssub.s32 %s17, %s29
      %s31 = ssub.s32 %s18, %s25
      %s32 = sor.u32 %s30, %s31
      %p33 = scmp.eq.s32.totalorder %s32, 0
      %s35 = sadd.s32 %s34, 1
      %s36 = scalar_select %p33, %s34, %s35
      %p39 = pneg %p33
      %p40 = scmp.eq.s32.totalorder %s10, 1
      %p41 = por %p39, %p40
      %p42 = scmp.ne.s32.totalorder %s34, %s37
      %p43 = scmp.eq.s32.totalorder %s10, 0
      %p44 = por %p42, %p43
      %p45 = scmp.ne.s32.totalorder %s34, %s37
      %p46 = scmp.eq.s32.totalorder %s15, 1
      %p47 = por %p45, %p46
      %p48 = scmp.ne.s32.totalorder %s37, %s38
      %p49 = scmp.eq.s32.totalorder %s15, 0
      %p50 = por %p48, %p49
      %p51 = scmp.ne.s32.totalorder %s37, %s38
      %p52 = scmp.eq.s32.totalorder %s16, 1
      %p53 = por %p51, %p52
      %p55 = scmp.ne.s32.totalorder %s38, %s54
      %p56 = scmp.eq.s32.totalorder %s16, 0
      %p57 = por %p55, %p56
      %s58 = ssub.s32 %s17, %s29
      %p59 = scmp.eq.s32.totalorder %s58, 0
      %s61 = sadd.s32 %s60, 1
      %s62 = scalar_select %p59, %s60, %s61
      %p65 = pneg %p59
      %p66 = scmp.eq.s32.totalorder %s10, 1
      %p67 = por %p65, %p66
      %p68 = scmp.ne.s32.totalorder %s60, %s63
      %p69 = scmp.eq.s32.totalorder %s10, 0
      %p70 = por %p68, %p69
      %p71 = scmp.ne.s32.totalorder %s60, %s63
      %p72 = scmp.eq.s32.totalorder %s15, 1
      %p73 = por %p71, %p72
      %p74 = scmp.ne.s32.totalorder %s63, %s64
      %p75 = scmp.eq.s32.totalorder %s15, 0
      %p76 = por %p74, %p75
      %p77 = scmp.ne.s32.totalorder %s63, %s64
      %p78 = scmp.eq.s32.totalorder %s16, 1
      %p79 = por %p77, %p78
      %p81 = scmp.ne.s32.totalorder %s64, %s80
      %p82 = scmp.eq.s32.totalorder %s16, 0
      %p83 = por %p81, %p82
      %p84 = scmp.le.s32.totalorder 1, %s10
      %p85 = scmp.lt.s32.totalorder %s10, 3
      %p86 = pnand %p84, %p85
      %p87 = pneg %p86
      // Predicated region
      $region9: #{se_adapter.2} parent=5 // pred_check
        _
      $region10: #{se_adapter.2} parent=5 // pred_check_branch
        %89 = sbr.rel (%p86) target = $region12
      $region11: #{se_adapter.2} parent=5 // pred_region
        %s90 = ssub.s32 %s10, 1
      $region12: #{se_adapter.2} parent=5 // pred_fallthru
        _
      %p91 = scmp.lt.s32.totalorder %s10, 2
      // Predicated region
      $region13: #{se_adapter.2} parent=5 // pred_check
        %p92 = pneg %p91
      $region14: #{se_adapter.2} parent=5 // pred_check_branch
        %94 = sbr.rel (%p92) target = $region16
      $region15: #{se_adapter.2} parent=5 // pred_region
        // Predicated region
        $region17: #{se_adapter.2} parent=15 // pred_check
          %p95 = pneg %p44
        $region18: #{se_adapter.2} parent=15 // pred_check_branch
          %97 = sbr.rel (%p95) target = $region20
        $region19: #{se_adapter.2} parent=15 // pred_region
          %s98 = sand.u32 %s34, 1
          %s99 = scalar_lea.sflag [#allocation3], %s98
          %s100 = sand.u32 %s34, 1
          %s101 = smul.addr %s100, 256
          %s102 = scalar_lea.vmem [#allocation2], %s101
          %s103 = smul.u32 32, %s18
          %105 = vsyncadd %s99, 0
          %s106 = smul.addr %s17, 32
          %s107 = sadd.s32 %s103, %s106
          %s108 = smul.addr %s107, 8
          %s109 = scalar_lea.hbm %s0, %s108
          %s110 = sshll.u32 %s109, 4
          %s111 = int_to_ptr.hbm [resolvable:$true] %s110
          %s112 = sshll.u32 %s102, 4
          %s113 = int_to_ptr.vmem [resolvable:$true] %s112
          %118 = dma.hbm_to_vmem [thread:$0]  %s111, 4096, %s113, %s99, 128, 128, 8
        $region20: #{se_adapter.2} parent=15 // pred_fallthru
          _
      $region16: #{se_adapter.2} parent=5 // pred_fallthru
        _
      %p119 = scmp.le.s32.totalorder 1, %s10
      %p120 = scmp.lt.s32.totalorder %s10, 3
      %p121 = pnand %p119, %p120
      %p122 = pneg %p121
      // Predicated region
      $region21: #{se_adapter.2} parent=5 // pred_check
        _
      $region22: #{se_adapter.2} parent=5 // pred_check_branch
        %124 = sbr.rel (%p121) target = $region24
      $region23: #{se_adapter.2} parent=5 // pred_region
        %s125 = ssub.s32 %s10, 1
        %s126 = sand.u32 %s37, 1
        %s127 = scalar_lea.sflag [#allocation3], %s126
        %s128 = sand.u32 %s37, 1
        %s129 = smul.addr %s128, 256
        %s130 = scalar_lea.vmem [#allocation2], %s129
        // Predicated region
        $region25: #{se_adapter.2} parent=23 // pred_check
          %p131 = pneg %p50
        $region26: #{se_adapter.2} parent=23 // pred_check_branch
          %133 = sbr.rel (%p131) target = $region28
        $region27: #{se_adapter.2} parent=23 // pred_region
          %135 = dma.done %s127, 4096
        $region28: #{se_adapter.2} parent=23 // pred_fallthru
          _
        %s136 = sand.u32 %s37, 1
        %s137 = scalar_lea.sflag [#allocation3], %s136
        %s138 = sand.u32 %s37, 1
        %s139 = smul.addr %s138, 256
        %s140 = scalar_lea.vmem [#allocation2], %s139
        %p141 = pneg %p50
        %p142 = pneg %p47
        %p143 = pneg %p76
        %p144 = pneg %p73
        %p145 = scmp.lt.s32.totalorder %s19, 1
        %s146 = scalar_select %p145, %s19, 1
        %s147 = scalar_lea.vmem %s1, %s146
        %s148 = smul.u32 32, %s20
        %p149 = scmp.lt.s32.totalorder %s19, 1
        %s150 = scalar_select %p149, %s19, 1
        %s151 = scalar_lea.vmem %s1, %s150
        %p152 = scmp.eq.s32.totalorder %s20, 0
        // Predicated region
        $region29: #{se_adapter.2} parent=23 // pred_check
          %p153 = pneg %p152
        $region30: #{se_adapter.2} parent=23 // pred_check_branch
          %155 = sbr.rel (%p153) target = $region32
        $region31: #{se_adapter.2} parent=23 // pred_region
          %vm156 = vcmask 253952
          %157 = vst.msk [vmem:[%s151] sm:$0x1] %vm156, 0.0
        $region32: #{se_adapter.2} parent=23 // pred_fallthru
          _
        %v158 = vld [vmem:[%s130] sm:$0xff]
        %v159 = vld [vmem:[%s130 + $0x8] sm:$0xff]
        %v160 = vld [vmem:[%s130 + $0x10] sm:$0xff]
        %v161 = vld [vmem:[%s130 + $0x18] sm:$0xff]
        %v162 = vld [vmem:[%s130 + $0x20] sm:$0xff]
        %v163 = vld [vmem:[%s130 + $0x28] sm:$0xff]
        %v164 = vld [vmem:[%s130 + $0x30] sm:$0xff]
        %v165 = vld [vmem:[%s130 + $0x38] sm:$0xff]
        %v166 = vld [vmem:[%s130 + $0x40] sm:$0xff]
        %v167 = vld [vmem:[%s130 + $0x48] sm:$0xff]
        %v168 = vld [vmem:[%s130 + $0x50] sm:$0xff]
        %v169 = vld [vmem:[%s130 + $0x58] sm:$0xff]
        %v170 = vld [vmem:[%s130 + $0x60] sm:$0xff]
        %v171 = vld [vmem:[%s130 + $0x68] sm:$0xff]
        %v172 = vld [vmem:[%s130 + $0x70] sm:$0xff]
        %v173 = vld [vmem:[%s130 + $0x78] sm:$0xff]
        %v174 = vld [vmem:[%s130 + $0x80] sm:$0xff]
        %v175 = vld [vmem:[%s130 + $0x88] sm:$0xff]
        %v176 = vld [vmem:[%s130 + $0x90] sm:$0xff]
        %v177 = vld [vmem:[%s130 + $0x98] sm:$0xff]
        %v178 = vld [vmem:[%s130 + $0xa0] sm:$0xff]
        %v179 = vld [vmem:[%s130 + $0xa8] sm:$0xff]
        %v180 = vld [vmem:[%s130 + $0xb0] sm:$0xff]
        %v181 = vld [vmem:[%s130 + $0xb8] sm:$0xff]
        %v182 = vld [vmem:[%s130 + $0xc0] sm:$0xff]
        %v183 = vld [vmem:[%s130 + $0xc8] sm:$0xff]
        %v184 = vld [vmem:[%s130 + $0xd0] sm:$0xff]
        %v185 = vld [vmem:[%s130 + $0xd8] sm:$0xff]
        %v186 = vld [vmem:[%s130 + $0xe0] sm:$0xff]
        %v187 = vld [vmem:[%s130 + $0xe8] sm:$0xff]
        %v188 = vld [vmem:[%s130 + $0xf0] sm:$0xff]
        %v189 = vld [vmem:[%s130 + $0xf8] sm:$0xff]
        %vm190 = vcmask 261120
        %v191 = vsel %vm190, %v158, 0.0
        %192 = vadd.xlane.f32.xlu0 %v191
        %v193 = vpop.xlane.xlu0 %192
        %v194 = vsel %vm190, %v159, 0.0
        %195 = vadd.xlane.f32.xlu0 %v194
        %v196 = vpop.xlane.xlu0 %195
        %v197 = vsel %vm190, %v160, 0.0
        %198 = vadd.xlane.f32.xlu0 %v197
        %v199 = vpop.xlane.xlu0 %198
        %v200 = vsel %vm190, %v161, 0.0
        %201 = vadd.xlane.f32.xlu0 %v200
        %v202 = vpop.xlane.xlu0 %201
        %v203 = vsel %vm190, %v162, 0.0
        %204 = vadd.xlane.f32.xlu0 %v203
        %v205 = vpop.xlane.xlu0 %204
        %v206 = vsel %vm190, %v163, 0.0
        %207 = vadd.xlane.f32.xlu0 %v206
        %v208 = vpop.xlane.xlu0 %207
        %v209 = vsel %vm190, %v164, 0.0
        %210 = vadd.xlane.f32.xlu0 %v209
        %v211 = vpop.xlane.xlu0 %210
        %v212 = vsel %vm190, %v165, 0.0
        %213 = vadd.xlane.f32.xlu0 %v212
        %v214 = vpop.xlane.xlu0 %213
        %v215 = vsel %vm190, %v166, 0.0
        %216 = vadd.xlane.f32.xlu0 %v215
        %v217 = vpop.xlane.xlu0 %216
        %v218 = vsel %vm190, %v167, 0.0
        %219 = vadd.xlane.f32.xlu0 %v218
        %v220 = vpop.xlane.xlu0 %219
        %v221 = vsel %vm190, %v168, 0.0
        %222 = vadd.xlane.f32.xlu0 %v221
        %v223 = vpop.xlane.xlu0 %222
        %v224 = vsel %vm190, %v169, 0.0
        %225 = vadd.xlane.f32.xlu0 %v224
        %v226 = vpop.xlane.xlu0 %225
        %v227 = vsel %vm190, %v170, 0.0
        %228 = vadd.xlane.f32.xlu0 %v227
        %v229 = vpop.xlane.xlu0 %228
        %v230 = vsel %vm190, %v171, 0.0
        %231 = vadd.xlane.f32.xlu0 %v230
        %v232 = vpop.xlane.xlu0 %231
        %v233 = vsel %vm190, %v172, 0.0
        %234 = vadd.xlane.f32.xlu0 %v233
        %v235 = vpop.xlane.xlu0 %234
        %v236 = vsel %vm190, %v173, 0.0
        %237 = vadd.xlane.f32.xlu0 %v236
        %v238 = vpop.xlane.xlu0 %237
        %v239 = vsel %vm190, %v174, 0.0
        %240 = vadd.xlane.f32.xlu0 %v239
        %v241 = vpop.xlane.xlu0 %240
        %v242 = vsel %vm190, %v175, 0.0
        %243 = vadd.xlane.f32.xlu0 %v242
        %v244 = vpop.xlane.xlu0 %243
        %v245 = vsel %vm190, %v176, 0.0
        %246 = vadd.xlane.f32.xlu0 %v245
        %v247 = vpop.xlane.xlu0 %246
        %v248 = vsel %vm190, %v177, 0.0
        %249 = vadd.xlane.f32.xlu0 %v248
        %v250 = vpop.xlane.xlu0 %249
        %v251 = vsel %vm190, %v178, 0.0
        %252 = vadd.xlane.f32.xlu0 %v251
        %v253 = vpop.xlane.xlu0 %252
        %v254 = vsel %vm190, %v179, 0.0
        %255 = vadd.xlane.f32.xlu0 %v254
        %v256 = vpop.xlane.xlu0 %255
        %v257 = vsel %vm190, %v180, 0.0
        %258 = vadd.xlane.f32.xlu0 %v257
        %v259 = vpop.xlane.xlu0 %258
        %v260 = vsel %vm190, %v181, 0.0
        %261 = vadd.xlane.f32.xlu0 %v260
        %v262 = vpop.xlane.xlu0 %261
        %v263 = vsel %vm190, %v182, 0.0
        %264 = vadd.xlane.f32.xlu0 %v263
        %v265 = vpop.xlane.xlu0 %264
        %v266 = vsel %vm190, %v183, 0.0
        %267 = vadd.xlane.f32.xlu0 %v266
        %v268 = vpop.xlane.xlu0 %267
        %v269 = vsel %vm190, %v184, 0.0
        %270 = vadd.xlane.f32.xlu0 %v269
        %v271 = vpop.xlane.xlu0 %270
        %v272 = vsel %vm190, %v185, 0.0
        %273 = vadd.xlane.f32.xlu0 %v272
        %v274 = vpop.xlane.xlu0 %273
        %v275 = vsel %vm190, %v186, 0.0
        %276 = vadd.xlane.f32.xlu0 %v275
        %v277 = vpop.xlane.xlu0 %276
        %v278 = vsel %vm190, %v187, 0.0
        %279 = vadd.xlane.f32.xlu0 %v278
        %v280 = vpop.xlane.xlu0 %279
        %v281 = vsel %vm190, %v188, 0.0
        %282 = vadd.xlane.f32.xlu0 %v281
        %v283 = vpop.xlane.xlu0 %282
        %v284 = vsel %vm190, %v189, 0.0
        %285 = vadd.xlane.f32.xlu0 %v284
        %v286 = vpop.xlane.xlu0 %285
        %v287 = vrcp.pop 32.0
        %v288 = vmul.f32 32.0, %v287
        %v289 = vsub.f32 1.0, %v288
        %v290 = vmul.f32 %v287, %v289
        %v291 = vadd.f32 %v287, %v290
        %vm292 = vweird.f32 %v287
        %v293 = vsel %vm292, %v287, %v291
        %v294 = vmul.f32 %v193, %v293
        %v295 = vmul.f32 %v196, %v293
        %v296 = vmul.f32 %v199, %v293
        %v297 = vmul.f32 %v202, %v293
        %v298 = vmul.f32 %v205, %v293
        %v299 = vmul.f32 %v208, %v293
        %v300 = vmul.f32 %v211, %v293
        %v301 = vmul.f32 %v214, %v293
        %v302 = vmul.f32 %v217, %v293
        %v303 = vmul.f32 %v220, %v293
        %v304 = vmul.f32 %v223, %v293
        %v305 = vmul.f32 %v226, %v293
        %v306 = vmul.f32 %v229, %v293
        %v307 = vmul.f32 %v232, %v293
        %v308 = vmul.f32 %v235, %v293
        %v309 = vmul.f32 %v238, %v293
        %v310 = vmul.f32 %v241, %v293
        %v311 = vmul.f32 %v244, %v293
        %v312 = vmul.f32 %v247, %v293
        %v313 = vmul.f32 %v250, %v293
        %v314 = vmul.f32 %v253, %v293
        %v315 = vmul.f32 %v256, %v293
        %v316 = vmul.f32 %v259, %v293
        %v317 = vmul.f32 %v262, %v293
        %v318 = vmul.f32 %v265, %v293
        %v319 = vmul.f32 %v268, %v293
        %v320 = vmul.f32 %v271, %v293
        %v321 = vmul.f32 %v274, %v293
        %v322 = vmul.f32 %v277, %v293
        %v323 = vmul.f32 %v280, %v293
        %v324 = vmul.f32 %v283, %v293
        %v325 = vmul.f32 %v286, %v293
        %v326 = vsub.f32 %v158, %v294
        %v327 = vsub.f32 %v159, %v295
        %v328 = vsub.f32 %v160, %v296
        %v329 = vsub.f32 %v161, %v297
        %v330 = vsub.f32 %v162, %v298
        %v331 = vsub.f32 %v163, %v299
        %v332 = vsub.f32 %v164, %v300
        %v333 = vsub.f32 %v165, %v301
        %v334 = vsub.f32 %v166, %v302
        %v335 = vsub.f32 %v167, %v303
        %v336 = vsub.f32 %v168, %v304
        %v337 = vsub.f32 %v169, %v305
        %v338 = vsub.f32 %v170, %v306
        %v339 = vsub.f32 %v171, %v307
        %v340 = vsub.f32 %v172, %v308
        %v341 = vsub.f32 %v173, %v309
        %v342 = vsub.f32 %v174, %v310
        %v343 = vsub.f32 %v175, %v311
        %v344 = vsub.f32 %v176, %v312
        %v345 = vsub.f32 %v177, %v313
        %v346 = vsub.f32 %v178, %v314
        %v347 = vsub.f32 %v179, %v315
        %v348 = vsub.f32 %v180, %v316
        %v349 = vsub.f32 %v181, %v317
        %v350 = vsub.f32 %v182, %v318
        %v351 = vsub.f32 %v183, %v319
        %v352 = vsub.f32 %v184, %v320
        %v353 = vsub.f32 %v185, %v321
        %v354 = vsub.f32 %v186, %v322
        %v355 = vsub.f32 %v187, %v323
        %v356 = vsub.f32 %v188, %v324
        %v357 = vsub.f32 %v189, %v325
        %v358 = vmul.f32 %v326, %v326
        %v359 = vmul.f32 %v327, %v327
        %v360 = vmul.f32 %v328, %v328
        %v361 = vmul.f32 %v329, %v329
        %v362 = vmul.f32 %v330, %v330
        %v363 = vmul.f32 %v331, %v331
        %v364 = vmul.f32 %v332, %v332
        %v365 = vmul.f32 %v333, %v333
        %v366 = vmul.f32 %v334, %v334
        %v367 = vmul.f32 %v335, %v335
        %v368 = vmul.f32 %v336, %v336
        %v369 = vmul.f32 %v337, %v337
        %v370 = vmul.f32 %v338, %v338
        %v371 = vmul.f32 %v339, %v339
        %v372 = vmul.f32 %v340, %v340
        %v373 = vmul.f32 %v341, %v341
        %v374 = vmul.f32 %v342, %v342
        %v375 = vmul.f32 %v343, %v343
        %v376 = vmul.f32 %v344, %v344
        %v377 = vmul.f32 %v345, %v345
        %v378 = vmul.f32 %v346, %v346
        %v379 = vmul.f32 %v347, %v347
        %v380 = vmul.f32 %v348, %v348
        %v381 = vmul.f32 %v349, %v349
        %v382 = vmul.f32 %v350, %v350
        %v383 = vmul.f32 %v351, %v351
        %v384 = vmul.f32 %v352, %v352
        %v385 = vmul.f32 %v353, %v353
        %v386 = vmul.f32 %v354, %v354
        %v387 = vmul.f32 %v355, %v355
        %v388 = vmul.f32 %v356, %v356
        %v389 = vmul.f32 %v357, %v357
        %v390 = vsel %vm190, %v358, 0.0
        %391 = vadd.xlane.f32.xlu0 %v390
        %v392 = vpop.xlane.xlu0 %391
        %v393 = vsel %vm190, %v359, 0.0
        %394 = vadd.xlane.f32.xlu0 %v393
        %v395 = vpop.xlane.xlu0 %394
        %v396 = vsel %vm190, %v360, 0.0
        %397 = vadd.xlane.f32.xlu0 %v396
        %v398 = vpop.xlane.xlu0 %397
        %v399 = vsel %vm190, %v361, 0.0
        %400 = vadd.xlane.f32.xlu0 %v399
        %v401 = vpop.xlane.xlu0 %400
        %v402 = vsel %vm190, %v362, 0.0
        %403 = vadd.xlane.f32.xlu0 %v402
        %v404 = vpop.xlane.xlu0 %403
        %v405 = vsel %vm190, %v363, 0.0
        %406 = vadd.xlane.f32.xlu0 %v405
        %v407 = vpop.xlane.xlu0 %406
        %v408 = vsel %vm190, %v364, 0.0
        %409 = vadd.xlane.f32.xlu0 %v408
        %v410 = vpop.xlane.xlu0 %409
        %v411 = vsel %vm190, %v365, 0.0
        %412 = vadd.xlane.f32.xlu0 %v411
        %v413 = vpop.xlane.xlu0 %412
        %v414 = vsel %vm190, %v366, 0.0
        %415 = vadd.xlane.f32.xlu0 %v414
        %v416 = vpop.xlane.xlu0 %415
        %v417 = vsel %vm190, %v367, 0.0
        %418 = vadd.xlane.f32.xlu0 %v417
        %v419 = vpop.xlane.xlu0 %418
        %v420 = vsel %vm190, %v368, 0.0
        %421 = vadd.xlane.f32.xlu0 %v420
        %v422 = vpop.xlane.xlu0 %421
        %v423 = vsel %vm190, %v369, 0.0
        %424 = vadd.xlane.f32.xlu0 %v423
        %v425 = vpop.xlane.xlu0 %424
        %v426 = vsel %vm190, %v370, 0.0
        %427 = vadd.xlane.f32.xlu0 %v426
        %v428 = vpop.xlane.xlu0 %427
        %v429 = vsel %vm190, %v371, 0.0
        %430 = vadd.xlane.f32.xlu0 %v429
        %v431 = vpop.xlane.xlu0 %430
        %v432 = vsel %vm190, %v372, 0.0
        %433 = vadd.xlane.f32.xlu0 %v432
        %v434 = vpop.xlane.xlu0 %433
        %v435 = vsel %vm190, %v373, 0.0
        %436 = vadd.xlane.f32.xlu0 %v435
        %v437 = vpop.xlane.xlu0 %436
        %v438 = vsel %vm190, %v374, 0.0
        %439 = vadd.xlane.f32.xlu0 %v438
        %v440 = vpop.xlane.xlu0 %439
        %v441 = vsel %vm190, %v375, 0.0
        %442 = vadd.xlane.f32.xlu0 %v441
        %v443 = vpop.xlane.xlu0 %442
        %v444 = vsel %vm190, %v376, 0.0
        %445 = vadd.xlane.f32.xlu0 %v444
        %v446 = vpop.xlane.xlu0 %445
        %v447 = vsel %vm190, %v377, 0.0
        %448 = vadd.xlane.f32.xlu0 %v447
        %v449 = vpop.xlane.xlu0 %448
        %v450 = vsel %vm190, %v378, 0.0
        %451 = vadd.xlane.f32.xlu0 %v450
        %v452 = vpop.xlane.xlu0 %451
        %v453 = vsel %vm190, %v379, 0.0
        %454 = vadd.xlane.f32.xlu0 %v453
        %v455 = vpop.xlane.xlu0 %454
        %v456 = vsel %vm190, %v380, 0.0
        %457 = vadd.xlane.f32.xlu0 %v456
        %v458 = vpop.xlane.xlu0 %457
        %v459 = vsel %vm190, %v381, 0.0
        %460 = vadd.xlane.f32.xlu0 %v459
        %v461 = vpop.xlane.xlu0 %460
        %v462 = vsel %vm190, %v382, 0.0
        %463 = vadd.xlane.f32.xlu0 %v462
        %v464 = vpop.xlane.xlu0 %463
        %v465 = vsel %vm190, %v383, 0.0
        %466 = vadd.xlane.f32.xlu0 %v465
        %v467 = vpop.xlane.xlu0 %466
        %v468 = vsel %vm190, %v384, 0.0
        %469 = vadd.xlane.f32.xlu0 %v468
        %v470 = vpop.xlane.xlu0 %469
        %v471 = vsel %vm190, %v385, 0.0
        %472 = vadd.xlane.f32.xlu0 %v471
        %v473 = vpop.xlane.xlu0 %472
        %v474 = vsel %vm190, %v386, 0.0
        %475 = vadd.xlane.f32.xlu0 %v474
        %v476 = vpop.xlane.xlu0 %475
        %v477 = vsel %vm190, %v387, 0.0
        %478 = vadd.xlane.f32.xlu0 %v477
        %v479 = vpop.xlane.xlu0 %478
        %v480 = vsel %vm190, %v388, 0.0
        %481 = vadd.xlane.f32.xlu0 %v480
        %v482 = vpop.xlane.xlu0 %481
        %v483 = vsel %vm190, %v389, 0.0
        %484 = vadd.xlane.f32.xlu0 %v483
        %v485 = vpop.xlane.xlu0 %484
        %v486 = vmul.f32 %v392, %v293
        %v487 = vmul.f32 %v395, %v293
        %v488 = vmul.f32 %v398, %v293
        %v489 = vmul.f32 %v401, %v293
        %v490 = vmul.f32 %v404, %v293
        %v491 = vmul.f32 %v407, %v293
        %v492 = vmul.f32 %v410, %v293
        %v493 = vmul.f32 %v413, %v293
        %v494 = vmul.f32 %v416, %v293
        %v495 = vmul.f32 %v419, %v293
        %v496 = vmul.f32 %v422, %v293
        %v497 = vmul.f32 %v425, %v293
        %v498 = vmul.f32 %v428, %v293
        %v499 = vmul.f32 %v431, %v293
        %v500 = vmul.f32 %v434, %v293
        %v501 = vmul.f32 %v437, %v293
        %v502 = vmul.f32 %v440, %v293
        %v503 = vmul.f32 %v443, %v293
        %v504 = vmul.f32 %v446, %v293
        %v505 = vmul.f32 %v449, %v293
        %v506 = vmul.f32 %v452, %v293
        %v507 = vmul.f32 %v455, %v293
        %v508 = vmul.f32 %v458, %v293
        %v509 = vmul.f32 %v461, %v293
        %v510 = vmul.f32 %v464, %v293
        %v511 = vmul.f32 %v467, %v293
        %v512 = vmul.f32 %v470, %v293
        %v513 = vmul.f32 %v473, %v293
        %v514 = vmul.f32 %v476, %v293
        %v515 = vmul.f32 %v479, %v293
        %v516 = vmul.f32 %v482, %v293
        %v517 = vmul.f32 %v485, %v293
        %v518 = vadd.f32 %v486, 1e-05
        %v519 = vadd.f32 %v487, 1e-05
        %v520 = vadd.f32 %v488, 1e-05
        %v521 = vadd.f32 %v489, 1e-05
        %v522 = vadd.f32 %v490, 1e-05
        %v523 = vadd.f32 %v491, 1e-05
        %v524 = vadd.f32 %v492, 1e-05
        %v525 = vadd.f32 %v493, 1e-05
        %v526 = vadd.f32 %v494, 1e-05
        %v527 = vadd.f32 %v495, 1e-05
        %v528 = vadd.f32 %v496, 1e-05
        %v529 = vadd.f32 %v497, 1e-05
        %v530 = vadd.f32 %v498, 1e-05
        %v531 = vadd.f32 %v499, 1e-05
        %v532 = vadd.f32 %v500, 1e-05
        %v533 = vadd.f32 %v501, 1e-05
        %v534 = vadd.f32 %v502, 1e-05
        %v535 = vadd.f32 %v503, 1e-05
        %v536 = vadd.f32 %v504, 1e-05
        %v537 = vadd.f32 %v505, 1e-05
        %v538 = vadd.f32 %v506, 1e-05
        %v539 = vadd.f32 %v507, 1e-05
        %v540 = vadd.f32 %v508, 1e-05
        %v541 = vadd.f32 %v509, 1e-05
        %v542 = vadd.f32 %v510, 1e-05
        %v543 = vadd.f32 %v511, 1e-05
        %v544 = vadd.f32 %v512, 1e-05
        %v545 = vadd.f32 %v513, 1e-05
        %v546 = vadd.f32 %v514, 1e-05
        %v547 = vadd.f32 %v515, 1e-05
        %v548 = vadd.f32 %v516, 1e-05
        %v549 = vadd.f32 %v517, 1e-05
        %v550 = vrsqrt.pop %v518
        %v551 = vmul.f32 %v550, %v518
        %v552 = vmul.f32 %v551, %v550
        %v553 = vmul.f32 0.5, %v552
        %v554 = vsub.f32 1.5, %v553
        %v555 = vmul.f32 %v550, %v554
        %vm556 = vweird.f32 %v518
        %vm557 = vweird.f32 %v550
        %vm558 = vmor %vm556, %vm557
        %v559 = vsel %vm558, %v550, %v555
        %v560 = vrsqrt.pop %v519
        %v561 = vmul.f32 %v560, %v519
        %v562 = vmul.f32 %v561, %v560
        %v563 = vmul.f32 0.5, %v562
        %v564 = vsub.f32 1.5, %v563
        %v565 = vmul.f32 %v560, %v564
        %vm566 = vweird.f32 %v519
        %vm567 = vweird.f32 %v560
        %vm568 = vmor %vm566, %vm567
        %v569 = vsel %vm568, %v560, %v565
        %v570 = vrsqrt.pop %v520
        %v571 = vmul.f32 %v570, %v520
        %v572 = vmul.f32 %v571, %v570
        %v573 = vmul.f32 0.5, %v572
        %v574 = vsub.f32 1.5, %v573
        %v575 = vmul.f32 %v570, %v574
        %vm576 = vweird.f32 %v520
        %vm577 = vweird.f32 %v570
        %vm578 = vmor %vm576, %vm577
        %v579 = vsel %vm578, %v570, %v575
        %v580 = vrsqrt.pop %v521
        %v581 = vmul.f32 %v580, %v521
        %v582 = vmul.f32 %v581, %v580
        %v583 = vmul.f32 0.5, %v582
        %v584 = vsub.f32 1.5, %v583
        %v585 = vmul.f32 %v580, %v584
        %vm586 = vweird.f32 %v521
        %vm587 = vweird.f32 %v580
        %vm588 = vmor %vm586, %vm587
        %v589 = vsel %vm588, %v580, %v585
        %v590 = vrsqrt.pop %v522
        %v591 = vmul.f32 %v590, %v522
        %v592 = vmul.f32 %v591, %v590
        %v593 = vmul.f32 0.5, %v592
        %v594 = vsub.f32 1.5, %v593
        %v595 = vmul.f32 %v590, %v594
        %vm596 = vweird.f32 %v522
        %vm597 = vweird.f32 %v590
        %vm598 = vmor %vm596, %vm597
        %v599 = vsel %vm598, %v590, %v595
        %v600 = vrsqrt.pop %v523
        %v601 = vmul.f32 %v600, %v523
        %v602 = vmul.f32 %v601, %v600
        %v603 = vmul.f32 0.5, %v602
        %v604 = vsub.f32 1.5, %v603
        %v605 = vmul.f32 %v600, %v604
        %vm606 = vweird.f32 %v523
        %vm607 = vweird.f32 %v600
        %vm608 = vmor %vm606, %vm607
        %v609 = vsel %vm608, %v600, %v605
        %v610 = vrsqrt.pop %v524
        %v611 = vmul.f32 %v610, %v524
        %v612 = vmul.f32 %v611, %v610
        %v613 = vmul.f32 0.5, %v612
        %v614 = vsub.f32 1.5, %v613
        %v615 = vmul.f32 %v610, %v614
        %vm616 = vweird.f32 %v524
        %vm617 = vweird.f32 %v610
        %vm618 = vmor %vm616, %vm617
        %v619 = vsel %vm618, %v610, %v615
        %v620 = vrsqrt.pop %v525
        %v621 = vmul.f32 %v620, %v525
        %v622 = vmul.f32 %v621, %v620
        %v623 = vmul.f32 0.5, %v622
        %v624 = vsub.f32 1.5, %v623
        %v625 = vmul.f32 %v620, %v624
        %vm626 = vweird.f32 %v525
        %vm627 = vweird.f32 %v620
        %vm628 = vmor %vm626, %vm627
        %v629 = vsel %vm628, %v620, %v625
        %v630 = vrsqrt.pop %v526
        %v631 = vmul.f32 %v630, %v526
        %v632 = vmul.f32 %v631, %v630
        %v633 = vmul.f32 0.5, %v632
        %v634 = vsub.f32 1.5, %v633
        %v635 = vmul.f32 %v630, %v634
        %vm636 = vweird.f32 %v526
        %vm637 = vweird.f32 %v630
        %vm638 = vmor %vm636, %vm637
        %v639 = vsel %vm638, %v630, %v635
        %v640 = vrsqrt.pop %v527
        %v641 = vmul.f32 %v640, %v527
        %v642 = vmul.f32 %v641, %v640
        %v643 = vmul.f32 0.5, %v642
        %v644 = vsub.f32 1.5, %v643
        %v645 = vmul.f32 %v640, %v644
        %vm646 = vweird.f32 %v527
        %vm647 = vweird.f32 %v640
        %vm648 = vmor %vm646, %vm647
        %v649 = vsel %vm648, %v640, %v645
        %v650 = vrsqrt.pop %v528
        %v651 = vmul.f32 %v650, %v528
        %v652 = vmul.f32 %v651, %v650
        %v653 = vmul.f32 0.5, %v652
        %v654 = vsub.f32 1.5, %v653
        %v655 = vmul.f32 %v650, %v654
        %vm656 = vweird.f32 %v528
        %vm657 = vweird.f32 %v650
        %vm658 = vmor %vm656, %vm657
        %v659 = vsel %vm658, %v650, %v655
        %v660 = vrsqrt.pop %v529
        %v661 = vmul.f32 %v660, %v529
        %v662 = vmul.f32 %v661, %v660
        %v663 = vmul.f32 0.5, %v662
        %v664 = vsub.f32 1.5, %v663
        %v665 = vmul.f32 %v660, %v664
        %vm666 = vweird.f32 %v529
        %vm667 = vweird.f32 %v660
        %vm668 = vmor %vm666, %vm667
        %v669 = vsel %vm668, %v660, %v665
        %v670 = vrsqrt.pop %v530
        %v671 = vmul.f32 %v670, %v530
        %v672 = vmul.f32 %v671, %v670
        %v673 = vmul.f32 0.5, %v672
        %v674 = vsub.f32 1.5, %v673
        %v675 = vmul.f32 %v670, %v674
        %vm676 = vweird.f32 %v530
        %vm677 = vweird.f32 %v670
        %vm678 = vmor %vm676, %vm677
        %v679 = vsel %vm678, %v670, %v675
        %v680 = vrsqrt.pop %v531
        %v681 = vmul.f32 %v680, %v531
        %v682 = vmul.f32 %v681, %v680
        %v683 = vmul.f32 0.5, %v682
        %v684 = vsub.f32 1.5, %v683
        %v685 = vmul.f32 %v680, %v684
        %vm686 = vweird.f32 %v531
        %vm687 = vweird.f32 %v680
        %vm688 = vmor %vm686, %vm687
        %v689 = vsel %vm688, %v680, %v685
        %v690 = vrsqrt.pop %v532
        %v691 = vmul.f32 %v690, %v532
        %v692 = vmul.f32 %v691, %v690
        %v693 = vmul.f32 0.5, %v692
        %v694 = vsub.f32 1.5, %v693
        %v695 = vmul.f32 %v690, %v694
        %vm696 = vweird.f32 %v532
        %vm697 = vweird.f32 %v690
        %vm698 = vmor %vm696, %vm697
        %v699 = vsel %vm698, %v690, %v695
        %v700 = vrsqrt.pop %v533
        %v701 = vmul.f32 %v700, %v533
        %v702 = vmul.f32 %v701, %v700
        %v703 = vmul.f32 0.5, %v702
        %v704 = vsub.f32 1.5, %v703
        %v705 = vmul.f32 %v700, %v704
        %vm706 = vweird.f32 %v533
        %vm707 = vweird.f32 %v700
        %vm708 = vmor %vm706, %vm707
        %v709 = vsel %vm708, %v700, %v705
        %v710 = vrsqrt.pop %v534
        %v711 = vmul.f32 %v710, %v534
        %v712 = vmul.f32 %v711, %v710
        %v713 = vmul.f32 0.5, %v712
        %v714 = vsub.f32 1.5, %v713
        %v715 = vmul.f32 %v710, %v714
        %vm716 = vweird.f32 %v534
        %vm717 = vweird.f32 %v710
        %vm718 = vmor %vm716, %vm717
        %v719 = vsel %vm718, %v710, %v715
        %v720 = vrsqrt.pop %v535
        %v721 = vmul.f32 %v720, %v535
        %v722 = vmul.f32 %v721, %v720
        %v723 = vmul.f32 0.5, %v722
        %v724 = vsub.f32 1.5, %v723
        %v725 = vmul.f32 %v720, %v724
        %vm726 = vweird.f32 %v535
        %vm727 = vweird.f32 %v720
        %vm728 = vmor %vm726, %vm727
        %v729 = vsel %vm728, %v720, %v725
        %v730 = vrsqrt.pop %v536
        %v731 = vmul.f32 %v730, %v536
        %v732 = vmul.f32 %v731, %v730
        %v733 = vmul.f32 0.5, %v732
        %v734 = vsub.f32 1.5, %v733
        %v735 = vmul.f32 %v730, %v734
        %vm736 = vweird.f32 %v536
        %vm737 = vweird.f32 %v730
        %vm738 = vmor %vm736, %vm737
        %v739 = vsel %vm738, %v730, %v735
        %v740 = vrsqrt.pop %v537
        %v741 = vmul.f32 %v740, %v537
        %v742 = vmul.f32 %v741, %v740
        %v743 = vmul.f32 0.5, %v742
        %v744 = vsub.f32 1.5, %v743
        %v745 = vmul.f32 %v740, %v744
        %vm746 = vweird.f32 %v537
        %vm747 = vweird.f32 %v740
        %vm748 = vmor %vm746, %vm747
        %v749 = vsel %vm748, %v740, %v745
        %v750 = vrsqrt.pop %v538
        %v751 = vmul.f32 %v750, %v538
        %v752 = vmul.f32 %v751, %v750
        %v753 = vmul.f32 0.5, %v752
        %v754 = vsub.f32 1.5, %v753
        %v755 = vmul.f32 %v750, %v754
        %vm756 = vweird.f32 %v538
        %vm757 = vweird.f32 %v750
        %vm758 = vmor %vm756, %vm757
        %v759 = vsel %vm758, %v750, %v755
        %v760 = vrsqrt.pop %v539
        %v761 = vmul.f32 %v760, %v539
        %v762 = vmul.f32 %v761, %v760
        %v763 = vmul.f32 0.5, %v762
        %v764 = vsub.f32 1.5, %v763
        %v765 = vmul.f32 %v760, %v764
        %vm766 = vweird.f32 %v539
        %vm767 = vweird.f32 %v760
        %vm768 = vmor %vm766, %vm767
        %v769 = vsel %vm768, %v760, %v765
        %v770 = vrsqrt.pop %v540
        %v771 = vmul.f32 %v770, %v540
        %v772 = vmul.f32 %v771, %v770
        %v773 = vmul.f32 0.5, %v772
        %v774 = vsub.f32 1.5, %v773
        %v775 = vmul.f32 %v770, %v774
        %vm776 = vweird.f32 %v540
        %vm777 = vweird.f32 %v770
        %vm778 = vmor %vm776, %vm777
        %v779 = vsel %vm778, %v770, %v775
        %v780 = vrsqrt.pop %v541
        %v781 = vmul.f32 %v780, %v541
        %v782 = vmul.f32 %v781, %v780
        %v783 = vmul.f32 0.5, %v782
        %v784 = vsub.f32 1.5, %v783
        %v785 = vmul.f32 %v780, %v784
        %vm786 = vweird.f32 %v541
        %vm787 = vweird.f32 %v780
        %vm788 = vmor %vm786, %vm787
        %v789 = vsel %vm788, %v780, %v785
        %v790 = vrsqrt.pop %v542
        %v791 = vmul.f32 %v790, %v542
        %v792 = vmul.f32 %v791, %v790
        %v793 = vmul.f32 0.5, %v792
        %v794 = vsub.f32 1.5, %v793
        %v795 = vmul.f32 %v790, %v794
        %vm796 = vweird.f32 %v542
        %vm797 = vweird.f32 %v790
        %vm798 = vmor %vm796, %vm797
        %v799 = vsel %vm798, %v790, %v795
        %v800 = vrsqrt.pop %v543
        %v801 = vmul.f32 %v800, %v543
        %v802 = vmul.f32 %v801, %v800
        %v803 = vmul.f32 0.5, %v802
        %v804 = vsub.f32 1.5, %v803
        %v805 = vmul.f32 %v800, %v804
        %vm806 = vweird.f32 %v543
        %vm807 = vweird.f32 %v800
        %vm808 = vmor %vm806, %vm807
        %v809 = vsel %vm808, %v800, %v805
        %v810 = vrsqrt.pop %v544
        %v811 = vmul.f32 %v810, %v544
        %v812 = vmul.f32 %v811, %v810
        %v813 = vmul.f32 0.5, %v812
        %v814 = vsub.f32 1.5, %v813
        %v815 = vmul.f32 %v810, %v814
        %vm816 = vweird.f32 %v544
        %vm817 = vweird.f32 %v810
        %vm818 = vmor %vm816, %vm817
        %v819 = vsel %vm818, %v810, %v815
        %v820 = vrsqrt.pop %v545
        %v821 = vmul.f32 %v820, %v545
        %v822 = vmul.f32 %v821, %v820
        %v823 = vmul.f32 0.5, %v822
        %v824 = vsub.f32 1.5, %v823
        %v825 = vmul.f32 %v820, %v824
        %vm826 = vweird.f32 %v545
        %vm827 = vweird.f32 %v820
        %vm828 = vmor %vm826, %vm827
        %v829 = vsel %vm828, %v820, %v825
        %v830 = vrsqrt.pop %v546
        %v831 = vmul.f32 %v830, %v546
        %v832 = vmul.f32 %v831, %v830
        %v833 = vmul.f32 0.5, %v832
        %v834 = vsub.f32 1.5, %v833
        %v835 = vmul.f32 %v830, %v834
        %vm836 = vweird.f32 %v546
        %vm837 = vweird.f32 %v830
        %vm838 = vmor %vm836, %vm837
        %v839 = vsel %vm838, %v830, %v835
        %v840 = vrsqrt.pop %v547
        %v841 = vmul.f32 %v840, %v547
        %v842 = vmul.f32 %v841, %v840
        %v843 = vmul.f32 0.5, %v842
        %v844 = vsub.f32 1.5, %v843
        %v845 = vmul.f32 %v840, %v844
        %vm846 = vweird.f32 %v547
        %vm847 = vweird.f32 %v840
        %vm848 = vmor %vm846, %vm847
        %v849 = vsel %vm848, %v840, %v845
        %v850 = vrsqrt.pop %v548
        %v851 = vmul.f32 %v850, %v548
        %v852 = vmul.f32 %v851, %v850
        %v853 = vmul.f32 0.5, %v852
        %v854 = vsub.f32 1.5, %v853
        %v855 = vmul.f32 %v850, %v854
        %vm856 = vweird.f32 %v548
        %vm857 = vweird.f32 %v850
        %vm858 = vmor %vm856, %vm857
        %v859 = vsel %vm858, %v850, %v855
        %v860 = vrsqrt.pop %v549
        %v861 = vmul.f32 %v860, %v549
        %v862 = vmul.f32 %v861, %v860
        %v863 = vmul.f32 0.5, %v862
        %v864 = vsub.f32 1.5, %v863
        %v865 = vmul.f32 %v860, %v864
        %vm866 = vweird.f32 %v549
        %vm867 = vweird.f32 %v860
        %vm868 = vmor %vm866, %vm867
        %v869 = vsel %vm868, %v860, %v865
        %v870 = vmul.f32 %v326, %v559
        %v871 = vmul.f32 %v327, %v569
        %v872 = vmul.f32 %v328, %v579
        %v873 = vmul.f32 %v329, %v589
        %v874 = vmul.f32 %v330, %v599
        %v875 = vmul.f32 %v331, %v609
        %v876 = vmul.f32 %v332, %v619
        %v877 = vmul.f32 %v333, %v629
        %v878 = vmul.f32 %v334, %v639
        %v879 = vmul.f32 %v335, %v649
        %v880 = vmul.f32 %v336, %v659
        %v881 = vmul.f32 %v337, %v669
        %v882 = vmul.f32 %v338, %v679
        %v883 = vmul.f32 %v339, %v689
        %v884 = vmul.f32 %v340, %v699
        %v885 = vmul.f32 %v341, %v709
        %v886 = vmul.f32 %v342, %v719
        %v887 = vmul.f32 %v343, %v729
        %v888 = vmul.f32 %v344, %v739
        %v889 = vmul.f32 %v345, %v749
        %v890 = vmul.f32 %v346, %v759
        %v891 = vmul.f32 %v347, %v769
        %v892 = vmul.f32 %v348, %v779
        %v893 = vmul.f32 %v349, %v789
        %v894 = vmul.f32 %v350, %v799
        %v895 = vmul.f32 %v351, %v809
        %v896 = vmul.f32 %v352, %v819
        %v897 = vmul.f32 %v353, %v829
        %v898 = vmul.f32 %v354, %v839
        %v899 = vmul.f32 %v355, %v849
        %v900 = vmul.f32 %v356, %v859
        %v901 = vmul.f32 %v357, %v869
        %v902 = vld [vmem:[%s151] sm:$0x1]
        %v903 = vsel %vm190, %v870, 0.0
        %v904 = vsel %vm190, %v871, 0.0
        %v905 = vadd.f32 %v903, %v904
        %v906 = vsel %vm190, %v872, 0.0
        %v907 = vadd.f32 %v905, %v906
        %v908 = vsel %vm190, %v873, 0.0
        %v909 = vadd.f32 %v907, %v908
        %v910 = vsel %vm190, %v874, 0.0
        %v911 = vadd.f32 %v909, %v910
        %v912 = vsel %vm190, %v875, 0.0
        %v913 = vadd.f32 %v911, %v912
        %v914 = vsel %vm190, %v876, 0.0
        %v915 = vadd.f32 %v913, %v914
        %v916 = vsel %vm190, %v877, 0.0
        %v917 = vadd.f32 %v915, %v916
        %v918 = vsel %vm190, %v878, 0.0
        %v919 = vadd.f32 %v917, %v918
        %v920 = vsel %vm190, %v879, 0.0
        %v921 = vadd.f32 %v919, %v920
        %v922 = vsel %vm190, %v880, 0.0
        %v923 = vadd.f32 %v921, %v922
        %v924 = vsel %vm190, %v881, 0.0
        %v925 = vadd.f32 %v923, %v924
        %v926 = vsel %vm190, %v882, 0.0
        %v927 = vadd.f32 %v925, %v926
        %v928 = vsel %vm190, %v883, 0.0
        %v929 = vadd.f32 %v927, %v928
        %v930 = vsel %vm190, %v884, 0.0
        %v931 = vadd.f32 %v929, %v930
        %v932 = vsel %vm190, %v885, 0.0
        %v933 = vadd.f32 %v931, %v932
        %v934 = vsel %vm190, %v886, 0.0
        %v935 = vadd.f32 %v933, %v934
        %v936 = vsel %vm190, %v887, 0.0
        %v937 = vadd.f32 %v935, %v936
        %v938 = vsel %vm190, %v888, 0.0
        %v939 = vadd.f32 %v937, %v938
        %v940 = vsel %vm190, %v889, 0.0
        %v941 = vadd.f32 %v939, %v940
        %v942 = vsel %vm190, %v890, 0.0
        %v943 = vadd.f32 %v941, %v942
        %v944 = vsel %vm190, %v891, 0.0
        %v945 = vadd.f32 %v943, %v944
        %v946 = vsel %vm190, %v892, 0.0
        %v947 = vadd.f32 %v945, %v946
        %v948 = vsel %vm190, %v893, 0.0
        %v949 = vadd.f32 %v947, %v948
        %v950 = vsel %vm190, %v894, 0.0
        %v951 = vadd.f32 %v949, %v950
        %v952 = vsel %vm190, %v895, 0.0
        %v953 = vadd.f32 %v951, %v952
        %v954 = vsel %vm190, %v896, 0.0
        %v955 = vadd.f32 %v953, %v954
        %v956 = vsel %vm190, %v897, 0.0
        %v957 = vadd.f32 %v955, %v956
        %v958 = vsel %vm190, %v898, 0.0
        %v959 = vadd.f32 %v957, %v958
        %v960 = vsel %vm190, %v899, 0.0
        %v961 = vadd.f32 %v959, %v960
        %v962 = vsel %vm190, %v900, 0.0
        %v963 = vadd.f32 %v961, %v962
        %v964 = vsel %vm190, %v901, 0.0
        %v965 = vadd.f32 %v963, %v964
        %v966 = vrot.slane %v965, 4
        %v967 = vadd.f32 %v965, %v966
        %v968 = vrot.slane %v967, 2
        %v969 = vadd.f32 %v967, %v968
        %v970 = vrot.slane %v969, 1
        %v971 = vadd.f32 %v969, %v970
        %v972 = vadd.f32 %v902, %v971
        %vm973 = vcmask 253952
        %974 = vst.msk [vmem:[%s151] sm:$0x1] %vm973, %v972
        %p975 = scmp.lt.s32.totalorder %s19, 1
        %s976 = scalar_select %p975, %s19, 1
        %s977 = scalar_lea.vmem %s1, %s976
        // Predicated region
        $region33: #{se_adapter.2} parent=23 // pred_check
          %p978 = pneg %p73
        $region34: #{se_adapter.2} parent=23 // pred_check_branch
          %980 = sbr.rel (%p978) target = $region36
        $region35: #{se_adapter.2} parent=23 // pred_region
          _
        $region36: #{se_adapter.2} parent=23 // pred_fallthru
          _
      $region24: #{se_adapter.2} parent=5 // pred_fallthru
        _
      %p981 = scmp.le.s32.totalorder 2, %s10
      // Predicated region
      $region37: #{se_adapter.2} parent=5 // pred_check
        %p982 = pneg %p981
      $region38: #{se_adapter.2} parent=5 // pred_check_branch
        %984 = sbr.rel (%p982) target = $region40
      $region39: #{se_adapter.2} parent=5 // pred_region
        %s985 = ssub.s32 %s10, 2
        // Predicated region
        $region41: #{se_adapter.2} parent=39 // pred_check
          %p986 = pneg %p79
        $region42: #{se_adapter.2} parent=39 // pred_check_branch
          %988 = sbr.rel (%p986) target = $region44
        $region43: #{se_adapter.2} parent=39 // pred_region
          %p989 = scmp.lt.s32.totalorder %s21, 1
          %s990 = scalar_select %p989, %s21, 1
          %s991 = scalar_lea.vmem %s1, %s990
        $region44: #{se_adapter.2} parent=39 // pred_fallthru
          _
      $region40: #{se_adapter.2} parent=5 // pred_fallthru
        _
    $region6: #{se_adapter.2} parent=1 // loop_footer
      %s14 = sadd.s32 1, %s10
    $region7: #{se_adapter.2} parent=1 // loop_footer_branch
      %9 = sbr.rel target = $region3
    $region8: #{se_adapter.2} parent=1 // loop_exit
      _
    %992 = vsyncpa [#allocation3], 1
    %s993 = scalar_lea.sflag [#allocation3], 1
    %994 = vsyncpa %s993, 1

// kernel: se_adapter.3
$region0: #{se_adapter.3}
  #allocation0 [shape = 'u32[]', space=smem, size = 0x4, offset = 0x4, fixed_abs, tag = 'smem constant byte address 0x4 - core index']
  #allocation1 [shape = 'u32[72,128]{1,0:T(1,128)}', space=vmem, size = 0x9000, scoped, tag = 'internal scratch']
  %s0 = inlined_call_operand.hbm [shape: f32[2,256,32], index: 0, kind: input, shape index: {}]
  %s1 = inlined_call_operand.vmem [shape: f32[2,1,32], index: 1, kind: input, shape index: {}]
  %s2 = inlined_call_operand.vmem [shape: f32[1,32], index: 2, kind: input, shape index: {}]
  %s3 = inlined_call_operand.vmem [shape: f32[1,32], index: 3, kind: input, shape index: {}]
  %s4 = inlined_call_operand.vmem [shape: f32[32,128], index: 4, kind: input, shape index: {}]
  %s5 = inlined_call_operand.vmem [shape: f32[1,128], index: 5, kind: input, shape index: {}]
  %s6 = inlined_call_operand.vmem [shape: f32[128,32], index: 6, kind: input, shape index: {}]
  %s7 = inlined_call_operand.vmem [shape: f32[1,32], index: 7, kind: input, shape index: {}]
  %s8 = inlined_call_operand.hbm [shape: f32[2,256,32], index: 8, kind: output, shape index: {}]
  %s9 = sld [smem:[#allocation0]]
  $region69: #{se_adapter.3} parent=0
    _
  %s11 = ssub.s32 1, %s9
  %s12 = scalar_select 0, %s11, %s9
  $region1: #{se_adapter.3} parent=0
    #allocation2 [shape = 'u8[262144]{0}', space=vmem, size = 0x40000, scoped, tag = 'input window, operand 0']
    #allocation3 [shape = 's32[2]{0}', space=sflag, size = 0x8, scoped, tag = 'scoped memory for se_adapter.3']
    #allocation4 [shape = 's32[2]{0}', space=sflag, size = 0x8, scoped, tag = 'scoped memory for se_adapter.3']
    #allocation5 [shape = 'u8[262144]{0}', space=vmem, size = 0x40000, scoped, tag = 'output window, operand 0']
    %13 = vsyncpa [#allocation3], 0
    %s14 = scalar_lea.sflag [#allocation3], 1
    %15 = vsyncpa %s14, 0
    %16 = vsyncpa [#allocation4], 0
    %s17 = scalar_lea.sflag [#allocation4], 1
    %18 = vsyncpa %s17, 0
    loop: start=0, step=1, limit=4
    $region2: #{se_adapter.3} parent=1 // loop_pre_header
      _
    $region3: #{se_adapter.3} parent=1 // loop_header
      %s20 = sphi 0, %s24
      %p21 = scmp.ge.s32.totalorder %s20, 4
      %s27 = sphi 0, %s39
      %s28 = sphi 0, %s35
      %s29 = sphi 0, %s27
      %s30 = sphi 0, %s28
      %s31 = sphi 0, %s29
      %s32 = sphi 0, %s30
      %s44 = sphi 0, %s46
      %s47 = sphi 0, %s44
      %s48 = sphi 0, %s47
      %s64 = sphi 0, %s48
      %s70 = sphi 0, %s72
      %s73 = sphi 0, %s70
      %s74 = sphi 0, %s73
      %s90 = sphi 0, %s74
      %s94 = sphi 0, %s94
      %s96 = sphi 0, %s94
      %s97 = sphi 0, %s96
      %s111 = sphi 0, %s97
      %s115 = sphi 0, %s115
      %s117 = sphi 0, %s115
      %s118 = sphi 0, %s117
      %s132 = sphi 0, %s118
      %s136 = sphi 0, %s136
      %s138 = sphi 0, %s136
      %s139 = sphi 0, %s138
      %s153 = sphi 0, %s139
      %s157 = sphi 0, %s157
      %s159 = sphi 0, %s157
      %s160 = sphi 0, %s159
      %s174 = sphi 0, %s160
      %s178 = sphi 0, %s178
      %s180 = sphi 0, %s178
      %s181 = sphi 0, %s180
      %s195 = sphi 0, %s181
      %s199 = sphi 0, %s199
      %s201 = sphi 0, %s199
      %s202 = sphi 0, %s201
      %s216 = sphi 0, %s202
      %s224 = sphi 0, %s226
      %s227 = sphi 0, %s224
      %s228 = sphi 0, %s227
      %s244 = sphi 0, %s228
    $region4: #{se_adapter.3} parent=1 // loop_header_branch
      %23 = sbr.rel (%p21) target = $region8
    $region5: #{se_adapter.3} parent=1 // loop_body
      %s25 = ssub.s32 %s20, 1
      %s26 = ssub.s32 %s20, 2
      %s33 = sadd.s32 1, %s28
      %p34 = scmp.ge.s32.totalorder %s33, 1
      %s35 = scalar_select %p34, 0, %s33
      %s36 = sadd.s32 1, %s27
      %s37 = scalar_select %p34, %s36, %s27
      %p38 = scmp.ge.s32.totalorder %s37, 2
      %s39 = scalar_select %p38, 0, %s37
      %s40 = ssub.s32 %s27, %s39
      %s41 = ssub.s32 %s28, %s35
      %s42 = sor.u32 %s40, %s41
      %p43 = scmp.eq.s32.totalorder %s42, 0
      %s45 = sadd.s32 %s44, 1
      %s46 = scalar_select %p43, %s44, %s45
      %p49 = pneg %p43
      %p50 = scmp.eq.s32.totalorder %s20, 1
      %p51 = por %p49, %p50
      %p52 = scmp.ne.s32.totalorder %s44, %s47
      %p53 = scmp.eq.s32.totalorder %s20, 0
      %p54 = por %p52, %p53
      %p55 = scmp.ne.s32.totalorder %s44, %s47
      %p56 = scmp.eq.s32.totalorder %s25, 1
      %p57 = por %p55, %p56
      %p58 = scmp.ne.s32.totalorder %s47, %s48
      %p59 = scmp.eq.s32.totalorder %s25, 0
      %p60 = por %p58, %p59
      %p61 = scmp.ne.s32.totalorder %s47, %s48
      %p62 = scmp.eq.s32.totalorder %s26, 1
      %p63 = por %p61, %p62
      %p65 = scmp.ne.s32.totalorder %s48, %s64
      %p66 = scmp.eq.s32.totalorder %s26, 0
      %p67 = por %p65, %p66
      %s68 = ssub.s32 %s27, %s39
      %p69 = scmp.eq.s32.totalorder %s68, 0
      %s71 = sadd.s32 %s70, 1
      %s72 = scalar_select %p69, %s70, %s71
      %p75 = pneg %p69
      %p76 = scmp.eq.s32.totalorder %s20, 1
      %p77 = por %p75, %p76
      %p78 = scmp.ne.s32.totalorder %s70, %s73
      %p79 = scmp.eq.s32.totalorder %s20, 0
      %p80 = por %p78, %p79
      %p81 = scmp.ne.s32.totalorder %s70, %s73
      %p82 = scmp.eq.s32.totalorder %s25, 1
      %p83 = por %p81, %p82
      %p84 = scmp.ne.s32.totalorder %s73, %s74
      %p85 = scmp.eq.s32.totalorder %s25, 0
      %p86 = por %p84, %p85
      %p87 = scmp.ne.s32.totalorder %s73, %s74
      %p88 = scmp.eq.s32.totalorder %s26, 1
      %p89 = por %p87, %p88
      %p91 = scmp.ne.s32.totalorder %s74, %s90
      %p92 = scmp.eq.s32.totalorder %s26, 0
      %p93 = por %p91, %p92
      %s95 = sadd.s32 %s94, 1
      %p98 = scmp.eq.s32.totalorder %s20, 1
      %p99 = scmp.ne.s32.totalorder %s94, %s96
      %p100 = scmp.eq.s32.totalorder %s20, 0
      %p101 = por %p99, %p100
      %p102 = scmp.ne.s32.totalorder %s94, %s96
      %p103 = scmp.eq.s32.totalorder %s25, 1
      %p104 = por %p102, %p103
      %p105 = scmp.ne.s32.totalorder %s96, %s97
      %p106 = scmp.eq.s32.totalorder %s25, 0
      %p107 = por %p105, %p106
      %p108 = scmp.ne.s32.totalorder %s96, %s97
      %p109 = scmp.eq.s32.totalorder %s26, 1
      %p110 = por %p108, %p109
      %p112 = scmp.ne.s32.totalorder %s97, %s111
      %p113 = scmp.eq.s32.totalorder %s26, 0
      %p114 = por %p112, %p113
      %s116 = sadd.s32 %s115, 1
      %p119 = scmp.eq.s32.totalorder %s20, 1
      %p120 = scmp.ne.s32.totalorder %s115, %s117
      %p121 = scmp.eq.s32.totalorder %s20, 0
      %p122 = por %p120, %p121
      %p123 = scmp.ne.s32.totalorder %s115, %s117
      %p124 = scmp.eq.s32.totalorder %s25, 1
      %p125 = por %p123, %p124
      %p126 = scmp.ne.s32.totalorder %s117, %s118
      %p127 = scmp.eq.s32.totalorder %s25, 0
      %p128 = por %p126, %p127
      %p129 = scmp.ne.s32.totalorder %s117, %s118
      %p130 = scmp.eq.s32.totalorder %s26, 1
      %p131 = por %p129, %p130
      %p133 = scmp.ne.s32.totalorder %s118, %s132
      %p134 = scmp.eq.s32.totalorder %s26, 0
      %p135 = por %p133, %p134
      %s137 = sadd.s32 %s136, 1
      %p140 = scmp.eq.s32.totalorder %s20, 1
      %p141 = scmp.ne.s32.totalorder %s136, %s138
      %p142 = scmp.eq.s32.totalorder %s20, 0
      %p143 = por %p141, %p142
      %p144 = scmp.ne.s32.totalorder %s136, %s138
      %p145 = scmp.eq.s32.totalorder %s25, 1
      %p146 = por %p144, %p145
      %p147 = scmp.ne.s32.totalorder %s138, %s139
      %p148 = scmp.eq.s32.totalorder %s25, 0
      %p149 = por %p147, %p148
      %p150 = scmp.ne.s32.totalorder %s138, %s139
      %p151 = scmp.eq.s32.totalorder %s26, 1
      %p152 = por %p150, %p151
      %p154 = scmp.ne.s32.totalorder %s139, %s153
      %p155 = scmp.eq.s32.totalorder %s26, 0
      %p156 = por %p154, %p155
      %s158 = sadd.s32 %s157, 1
      %p161 = scmp.eq.s32.totalorder %s20, 1
      %p162 = scmp.ne.s32.totalorder %s157, %s159
      %p163 = scmp.eq.s32.totalorder %s20, 0
      %p164 = por %p162, %p163
      %p165 = scmp.ne.s32.totalorder %s157, %s159
      %p166 = scmp.eq.s32.totalorder %s25, 1
      %p167 = por %p165, %p166
      %p168 = scmp.ne.s32.totalorder %s159, %s160
      %p169 = scmp.eq.s32.totalorder %s25, 0
      %p170 = por %p168, %p169
      %p171 = scmp.ne.s32.totalorder %s159, %s160
      %p172 = scmp.eq.s32.totalorder %s26, 1
      %p173 = por %p171, %p172
      %p175 = scmp.ne.s32.totalorder %s160, %s174
      %p176 = scmp.eq.s32.totalorder %s26, 0
      %p177 = por %p175, %p176
      %s179 = sadd.s32 %s178, 1
      %p182 = scmp.eq.s32.totalorder %s20, 1
      %p183 = scmp.ne.s32.totalorder %s178, %s180
      %p184 = scmp.eq.s32.totalorder %s20, 0
      %p185 = por %p183, %p184
      %p186 = scmp.ne.s32.totalorder %s178, %s180
      %p187 = scmp.eq.s32.totalorder %s25, 1
      %p188 = por %p186, %p187
      %p189 = scmp.ne.s32.totalorder %s180, %s181
      %p190 = scmp.eq.s32.totalorder %s25, 0
      %p191 = por %p189, %p190
      %p192 = scmp.ne.s32.totalorder %s180, %s181
      %p193 = scmp.eq.s32.totalorder %s26, 1
      %p194 = por %p192, %p193
      %p196 = scmp.ne.s32.totalorder %s181, %s195
      %p197 = scmp.eq.s32.totalorder %s26, 0
      %p198 = por %p196, %p197
      %s200 = sadd.s32 %s199, 1
      %p203 = scmp.eq.s32.totalorder %s20, 1
      %p204 = scmp.ne.s32.totalorder %s199, %s201
      %p205 = scmp.eq.s32.totalorder %s20, 0
      %p206 = por %p204, %p205
      %p207 = scmp.ne.s32.totalorder %s199, %s201
      %p208 = scmp.eq.s32.totalorder %s25, 1
      %p209 = por %p207, %p208
      %p210 = scmp.ne.s32.totalorder %s201, %s202
      %p211 = scmp.eq.s32.totalorder %s25, 0
      %p212 = por %p210, %p211
      %p213 = scmp.ne.s32.totalorder %s201, %s202
      %p214 = scmp.eq.s32.totalorder %s26, 1
      %p215 = por %p213, %p214
      %p217 = scmp.ne.s32.totalorder %s202, %s216
      %p218 = scmp.eq.s32.totalorder %s26, 0
      %p219 = por %p217, %p218
      %s220 = ssub.s32 %s27, %s39
      %s221 = ssub.s32 %s28, %s35
      %s222 = sor.u32 %s220, %s221
      %p223 = scmp.eq.s32.totalorder %s222, 0
      %s225 = sadd.s32 %s224, 1
      %s226 = scalar_select %p223, %s224, %s225
      %p229 = pneg %p223
      %p230 = scmp.eq.s32.totalorder %s20, 1
      %p231 = por %p229, %p230
      %p232 = scmp.ne.s32.totalorder %s224, %s227
      %p233 = scmp.eq.s32.totalorder %s20, 0
      %p234 = por %p232, %p233
      %p235 = scmp.ne.s32.totalorder %s224, %s227
      %p236 = scmp.eq.s32.totalorder %s25, 1
      %p237 = por %p235, %p236
      %p238 = scmp.ne.s32.totalorder %s227, %s228
      %p239 = scmp.eq.s32.totalorder %s25, 0
      %p240 = por %p238, %p239
      %p241 = scmp.ne.s32.totalorder %s227, %s228
      %p242 = scmp.eq.s32.totalorder %s26, 1
      %p243 = por %p241, %p242
      %p245 = scmp.ne.s32.totalorder %s228, %s244
      %p246 = scmp.eq.s32.totalorder %s26, 0
      %p247 = por %p245, %p246
      %p248 = scmp.le.s32.totalorder 1, %s20
      %p249 = scmp.lt.s32.totalorder %s20, 3
      %p250 = pnand %p248, %p249
      %p251 = pneg %p250
      // Predicated region
      $region9: #{se_adapter.3} parent=5 // pred_check
        _
      $region10: #{se_adapter.3} parent=5 // pred_check_branch
        %253 = sbr.rel (%p250) target = $region12
      $region11: #{se_adapter.3} parent=5 // pred_region
        %s254 = ssub.s32 %s20, 1
        // Predicated region
        $region13: #{se_adapter.3} parent=11 // pred_check
          %p255 = pneg %p107
        $region14: #{se_adapter.3} parent=11 // pred_check_branch
          %257 = sbr.rel (%p255) target = $region16
        $region15: #{se_adapter.3} parent=11 // pred_region
          _
        $region16: #{se_adapter.3} parent=11 // pred_fallthru
          _
        // Predicated region
        $region17: #{se_adapter.3} parent=11 // pred_check
          %p258 = pneg %p128
        $region18: #{se_adapter.3} parent=11 // pred_check_branch
          %260 = sbr.rel (%p258) target = $region20
        $region19: #{se_adapter.3} parent=11 // pred_region
          _
        $region20: #{se_adapter.3} parent=11 // pred_fallthru
          _
        // Predicated region
        $region21: #{se_adapter.3} parent=11 // pred_check
          %p261 = pneg %p149
        $region22: #{se_adapter.3} parent=11 // pred_check_branch
          %263 = sbr.rel (%p261) target = $region24
        $region23: #{se_adapter.3} parent=11 // pred_region
          _
        $region24: #{se_adapter.3} parent=11 // pred_fallthru
          _
        // Predicated region
        $region25: #{se_adapter.3} parent=11 // pred_check
          %p264 = pneg %p170
        $region26: #{se_adapter.3} parent=11 // pred_check_branch
          %266 = sbr.rel (%p264) target = $region28
        $region27: #{se_adapter.3} parent=11 // pred_region
          _
        $region28: #{se_adapter.3} parent=11 // pred_fallthru
          _
        // Predicated region
        $region29: #{se_adapter.3} parent=11 // pred_check
          %p267 = pneg %p191
        $region30: #{se_adapter.3} parent=11 // pred_check_branch
          %269 = sbr.rel (%p267) target = $region32
        $region31: #{se_adapter.3} parent=11 // pred_region
          _
        $region32: #{se_adapter.3} parent=11 // pred_fallthru
          _
        // Predicated region
        $region33: #{se_adapter.3} parent=11 // pred_check
          %p270 = pneg %p212
        $region34: #{se_adapter.3} parent=11 // pred_check_branch
          %272 = sbr.rel (%p270) target = $region36
        $region35: #{se_adapter.3} parent=11 // pred_region
          _
        $region36: #{se_adapter.3} parent=11 // pred_fallthru
          _
      $region12: #{se_adapter.3} parent=5 // pred_fallthru
        _
      %p273 = scmp.lt.s32.totalorder %s20, 2
      // Predicated region
      $region37: #{se_adapter.3} parent=5 // pred_check
        %p274 = pneg %p273
      $region38: #{se_adapter.3} parent=5 // pred_check_branch
        %276 = sbr.rel (%p274) target = $region40
      $region39: #{se_adapter.3} parent=5 // pred_region
        // Predicated region
        $region41: #{se_adapter.3} parent=39 // pred_check
          %p277 = pneg %p54
        $region42: #{se_adapter.3} parent=39 // pred_check_branch
          %279 = sbr.rel (%p277) target = $region44
        $region43: #{se_adapter.3} parent=39 // pred_region
          %s280 = sand.u32 %s44, 1
          %s281 = scalar_lea.sflag [#allocation3], %s280
          %s282 = sand.u32 %s44, 1
          %s283 = smul.addr %s282, 256
          %s284 = scalar_lea.vmem [#allocation2], %s283
          %s285 = smul.u32 32, %s28
          %287 = vsyncadd %s281, 0
          %s288 = smul.addr %s27, 32
          %s289 = sadd.s32 %s285, %s288
          %s290 = smul.addr %s289, 8
          %s291 = scalar_lea.hbm %s0, %s290
          %s292 = sshll.u32 %s291, 4
          %s293 = int_to_ptr.hbm [resolvable:$true] %s292
          %s294 = sshll.u32 %s284, 4
          %s295 = int_to_ptr.vmem [resolvable:$true] %s294
          %300 = dma.hbm_to_vmem [thread:$0]  %s293, 4096, %s295, %s281, 128, 128, 8
        $region44: #{se_adapter.3} parent=39 // pred_fallthru
          _
        // Predicated region
        $region45: #{se_adapter.3} parent=39 // pred_check
          %p301 = pneg %p80
        $region46: #{se_adapter.3} parent=39 // pred_check_branch
          %303 = sbr.rel (%p301) target = $region48
        $region47: #{se_adapter.3} parent=39 // pred_region
          %p304 = scmp.lt.s32.totalorder %s27, 1
          %s305 = scalar_select %p304, %s27, 1
          %s306 = scalar_lea.vmem %s1, %s305
        $region48: #{se_adapter.3} parent=39 // pred_fallthru
          _
      $region40: #{se_adapter.3} parent=5 // pred_fallthru
        _
      %p307 = scmp.le.s32.totalorder 1, %s20
      %p308 = scmp.lt.s32.totalorder %s20, 3
      %p309 = pnand %p307, %p308
      %p310 = pneg %p309
      // Predicated region
      $region49: #{se_adapter.3} parent=5 // pred_check
        _
      $region50: #{se_adapter.3} parent=5 // pred_check_branch
        %312 = sbr.rel (%p309) target = $region52
      $region51: #{se_adapter.3} parent=5 // pred_region
        %s313 = ssub.s32 %s20, 1
        %s314 = sand.u32 %s47, 1
        %s315 = scalar_lea.sflag [#allocation3], %s314
        %s316 = sand.u32 %s47, 1
        %s317 = smul.addr %s316, 256
        %s318 = scalar_lea.vmem [#allocation2], %s317
        // Predicated region
        $region53: #{se_adapter.3} parent=51 // pred_check
          %p319 = pneg %p60
        $region54: #{se_adapter.3} parent=51 // pred_check_branch
          %321 = sbr.rel (%p319) target = $region56
        $region55: #{se_adapter.3} parent=51 // pred_region
          %323 = dma.done %s315, 4096
        $region56: #{se_adapter.3} parent=51 // pred_fallthru
          _
        %s324 = sand.u32 %s47, 1
        %s325 = scalar_lea.sflag [#allocation3], %s324
        %s326 = sand.u32 %s47, 1
        %s327 = smul.addr %s326, 256
        %s328 = scalar_lea.vmem [#allocation2], %s327
        %p329 = pneg %p60
        %p330 = pneg %p57
        %p331 = scmp.lt.s32.totalorder %s29, 1
        %s332 = scalar_select %p331, %s29, 1
        %s333 = scalar_lea.vmem %s1, %s332
        %p334 = pneg %p86
        %p335 = pneg %p83
        %p336 = pneg %p107
        %p337 = pneg %p104
        %p338 = pneg %p128
        %p339 = pneg %p125
        %p340 = pneg %p149
        %p341 = pneg %p146
        %p342 = pneg %p170
        %p343 = pneg %p167
        %p344 = pneg %p191
        %p345 = pneg %p188
        %p346 = pneg %p212
        %p347 = pneg %p209
        %p348 = pneg %p240
        %p349 = pneg %p237
        %s350 = sand.u32 %s227, 1
        %s351 = scalar_lea.sflag [#allocation4], %s350
        %s352 = sand.u32 %s227, 1
        %s353 = smul.addr %s352, 256
        %s354 = scalar_lea.vmem [#allocation5], %s353
        %s355 = smul.u32 32, %s30
        %p356 = scmp.lt.s32.totalorder %s29, 1
        %s357 = scalar_select %p356, %s29, 1
        %s358 = scalar_lea.vmem %s1, %s357
        %s359 = smul.u32 32, %s30
        %v360 = vld [vmem:[%s318] sm:$0xff]
        %v361 = vld [vmem:[%s318 + $0x8] sm:$0xff]
        %v362 = vld [vmem:[%s318 + $0x10] sm:$0xff]
        %v363 = vld [vmem:[%s318 + $0x18] sm:$0xff]
        %v364 = vld [vmem:[%s318 + $0x20] sm:$0xff]
        %v365 = vld [vmem:[%s318 + $0x28] sm:$0xff]
        %v366 = vld [vmem:[%s318 + $0x30] sm:$0xff]
        %v367 = vld [vmem:[%s318 + $0x38] sm:$0xff]
        %v368 = vld [vmem:[%s318 + $0x40] sm:$0xff]
        %v369 = vld [vmem:[%s318 + $0x48] sm:$0xff]
        %v370 = vld [vmem:[%s318 + $0x50] sm:$0xff]
        %v371 = vld [vmem:[%s318 + $0x58] sm:$0xff]
        %v372 = vld [vmem:[%s318 + $0x60] sm:$0xff]
        %v373 = vld [vmem:[%s318 + $0x68] sm:$0xff]
        %v374 = vld [vmem:[%s318 + $0x70] sm:$0xff]
        %v375 = vld [vmem:[%s318 + $0x78] sm:$0xff]
        %v376 = vld [vmem:[%s318 + $0x80] sm:$0xff]
        %v377 = vld [vmem:[%s318 + $0x88] sm:$0xff]
        %v378 = vld [vmem:[%s318 + $0x90] sm:$0xff]
        %v379 = vld [vmem:[%s318 + $0x98] sm:$0xff]
        %v380 = vld [vmem:[%s318 + $0xa0] sm:$0xff]
        %v381 = vld [vmem:[%s318 + $0xa8] sm:$0xff]
        %v382 = vld [vmem:[%s318 + $0xb0] sm:$0xff]
        %v383 = vld [vmem:[%s318 + $0xb8] sm:$0xff]
        %v384 = vld [vmem:[%s318 + $0xc0] sm:$0xff]
        %v385 = vld [vmem:[%s318 + $0xc8] sm:$0xff]
        %v386 = vld [vmem:[%s318 + $0xd0] sm:$0xff]
        %v387 = vld [vmem:[%s318 + $0xd8] sm:$0xff]
        %v388 = vld [vmem:[%s318 + $0xe0] sm:$0xff]
        %v389 = vld [vmem:[%s318 + $0xe8] sm:$0xff]
        %v390 = vld [vmem:[%s318 + $0xf0] sm:$0xff]
        %v391 = vld [vmem:[%s318 + $0xf8] sm:$0xff]
        %vm392 = vcmask 261120
        %v393 = vsel %vm392, %v360, 0.0
        %394 = vadd.xlane.f32.xlu0 %v393
        %v395 = vpop.xlane.xlu0 %394
        %v396 = vsel %vm392, %v361, 0.0
        %397 = vadd.xlane.f32.xlu0 %v396
        %v398 = vpop.xlane.xlu0 %397
        %v399 = vsel %vm392, %v362, 0.0
        %400 = vadd.xlane.f32.xlu0 %v399
        %v401 = vpop.xlane.xlu0 %400
        %v402 = vsel %vm392, %v363, 0.0
        %403 = vadd.xlane.f32.xlu0 %v402
        %v404 = vpop.xlane.xlu0 %403
        %v405 = vsel %vm392, %v364, 0.0
        %406 = vadd.xlane.f32.xlu0 %v405
        %v407 = vpop.xlane.xlu0 %406
        %v408 = vsel %vm392, %v365, 0.0
        %409 = vadd.xlane.f32.xlu0 %v408
        %v410 = vpop.xlane.xlu0 %409
        %v411 = vsel %vm392, %v366, 0.0
        %412 = vadd.xlane.f32.xlu0 %v411
        %v413 = vpop.xlane.xlu0 %412
        %v414 = vsel %vm392, %v367, 0.0
        %415 = vadd.xlane.f32.xlu0 %v414
        %v416 = vpop.xlane.xlu0 %415
        %v417 = vsel %vm392, %v368, 0.0
        %418 = vadd.xlane.f32.xlu0 %v417
        %v419 = vpop.xlane.xlu0 %418
        %v420 = vsel %vm392, %v369, 0.0
        %421 = vadd.xlane.f32.xlu0 %v420
        %v422 = vpop.xlane.xlu0 %421
        %v423 = vsel %vm392, %v370, 0.0
        %424 = vadd.xlane.f32.xlu0 %v423
        %v425 = vpop.xlane.xlu0 %424
        %v426 = vsel %vm392, %v371, 0.0
        %427 = vadd.xlane.f32.xlu0 %v426
        %v428 = vpop.xlane.xlu0 %427
        %v429 = vsel %vm392, %v372, 0.0
        %430 = vadd.xlane.f32.xlu0 %v429
        %v431 = vpop.xlane.xlu0 %430
        %v432 = vsel %vm392, %v373, 0.0
        %433 = vadd.xlane.f32.xlu0 %v432
        %v434 = vpop.xlane.xlu0 %433
        %v435 = vsel %vm392, %v374, 0.0
        %436 = vadd.xlane.f32.xlu0 %v435
        %v437 = vpop.xlane.xlu0 %436
        %v438 = vsel %vm392, %v375, 0.0
        %439 = vadd.xlane.f32.xlu0 %v438
        %v440 = vpop.xlane.xlu0 %439
        %v441 = vsel %vm392, %v376, 0.0
        %442 = vadd.xlane.f32.xlu0 %v441
        %v443 = vpop.xlane.xlu0 %442
        %v444 = vsel %vm392, %v377, 0.0
        %445 = vadd.xlane.f32.xlu0 %v444
        %v446 = vpop.xlane.xlu0 %445
        %v447 = vsel %vm392, %v378, 0.0
        %448 = vadd.xlane.f32.xlu0 %v447
        %v449 = vpop.xlane.xlu0 %448
        %v450 = vsel %vm392, %v379, 0.0
        %451 = vadd.xlane.f32.xlu0 %v450
        %v452 = vpop.xlane.xlu0 %451
        %v453 = vsel %vm392, %v380, 0.0
        %454 = vadd.xlane.f32.xlu0 %v453
        %v455 = vpop.xlane.xlu0 %454
        %v456 = vsel %vm392, %v381, 0.0
        %457 = vadd.xlane.f32.xlu0 %v456
        %v458 = vpop.xlane.xlu0 %457
        %v459 = vsel %vm392, %v382, 0.0
        %460 = vadd.xlane.f32.xlu0 %v459
        %v461 = vpop.xlane.xlu0 %460
        %v462 = vsel %vm392, %v383, 0.0
        %463 = vadd.xlane.f32.xlu0 %v462
        %v464 = vpop.xlane.xlu0 %463
        %v465 = vsel %vm392, %v384, 0.0
        %466 = vadd.xlane.f32.xlu0 %v465
        %v467 = vpop.xlane.xlu0 %466
        %v468 = vsel %vm392, %v385, 0.0
        %469 = vadd.xlane.f32.xlu0 %v468
        %v470 = vpop.xlane.xlu0 %469
        %v471 = vsel %vm392, %v386, 0.0
        %472 = vadd.xlane.f32.xlu0 %v471
        %v473 = vpop.xlane.xlu0 %472
        %v474 = vsel %vm392, %v387, 0.0
        %475 = vadd.xlane.f32.xlu0 %v474
        %v476 = vpop.xlane.xlu0 %475
        %v477 = vsel %vm392, %v388, 0.0
        %478 = vadd.xlane.f32.xlu0 %v477
        %v479 = vpop.xlane.xlu0 %478
        %v480 = vsel %vm392, %v389, 0.0
        %481 = vadd.xlane.f32.xlu0 %v480
        %v482 = vpop.xlane.xlu0 %481
        %v483 = vsel %vm392, %v390, 0.0
        %484 = vadd.xlane.f32.xlu0 %v483
        %v485 = vpop.xlane.xlu0 %484
        %v486 = vsel %vm392, %v391, 0.0
        %487 = vadd.xlane.f32.xlu0 %v486
        %v488 = vpop.xlane.xlu0 %487
        %v489 = vrcp.pop 32.0
        %v490 = vmul.f32 32.0, %v489
        %v491 = vsub.f32 1.0, %v490
        %v492 = vmul.f32 %v489, %v491
        %v493 = vadd.f32 %v489, %v492
        %vm494 = vweird.f32 %v489
        %v495 = vsel %vm494, %v489, %v493
        %v496 = vmul.f32 %v395, %v495
        %v497 = vmul.f32 %v398, %v495
        %v498 = vmul.f32 %v401, %v495
        %v499 = vmul.f32 %v404, %v495
        %v500 = vmul.f32 %v407, %v495
        %v501 = vmul.f32 %v410, %v495
        %v502 = vmul.f32 %v413, %v495
        %v503 = vmul.f32 %v416, %v495
        %v504 = vmul.f32 %v419, %v495
        %v505 = vmul.f32 %v422, %v495
        %v506 = vmul.f32 %v425, %v495
        %v507 = vmul.f32 %v428, %v495
        %v508 = vmul.f32 %v431, %v495
        %v509 = vmul.f32 %v434, %v495
        %v510 = vmul.f32 %v437, %v495
        %v511 = vmul.f32 %v440, %v495
        %v512 = vmul.f32 %v443, %v495
        %v513 = vmul.f32 %v446, %v495
        %v514 = vmul.f32 %v449, %v495
        %v515 = vmul.f32 %v452, %v495
        %v516 = vmul.f32 %v455, %v495
        %v517 = vmul.f32 %v458, %v495
        %v518 = vmul.f32 %v461, %v495
        %v519 = vmul.f32 %v464, %v495
        %v520 = vmul.f32 %v467, %v495
        %v521 = vmul.f32 %v470, %v495
        %v522 = vmul.f32 %v473, %v495
        %v523 = vmul.f32 %v476, %v495
        %v524 = vmul.f32 %v479, %v495
        %v525 = vmul.f32 %v482, %v495
        %v526 = vmul.f32 %v485, %v495
        %v527 = vmul.f32 %v488, %v495
        %v528 = vsub.f32 %v360, %v496
        %v529 = vsub.f32 %v361, %v497
        %v530 = vsub.f32 %v362, %v498
        %v531 = vsub.f32 %v363, %v499
        %v532 = vsub.f32 %v364, %v500
        %v533 = vsub.f32 %v365, %v501
        %v534 = vsub.f32 %v366, %v502
        %v535 = vsub.f32 %v367, %v503
        %v536 = vsub.f32 %v368, %v504
        %v537 = vsub.f32 %v369, %v505
        %v538 = vsub.f32 %v370, %v506
        %v539 = vsub.f32 %v371, %v507
        %v540 = vsub.f32 %v372, %v508
        %v541 = vsub.f32 %v373, %v509
        %v542 = vsub.f32 %v374, %v510
        %v543 = vsub.f32 %v375, %v511
        %v544 = vsub.f32 %v376, %v512
        %v545 = vsub.f32 %v377, %v513
        %v546 = vsub.f32 %v378, %v514
        %v547 = vsub.f32 %v379, %v515
        %v548 = vsub.f32 %v380, %v516
        %v549 = vsub.f32 %v381, %v517
        %v550 = vsub.f32 %v382, %v518
        %v551 = vsub.f32 %v383, %v519
        %v552 = vsub.f32 %v384, %v520
        %v553 = vsub.f32 %v385, %v521
        %v554 = vsub.f32 %v386, %v522
        %v555 = vsub.f32 %v387, %v523
        %v556 = vsub.f32 %v388, %v524
        %v557 = vsub.f32 %v389, %v525
        %v558 = vsub.f32 %v390, %v526
        %v559 = vsub.f32 %v391, %v527
        %v560 = vmul.f32 %v528, %v528
        %v561 = vmul.f32 %v529, %v529
        %v562 = vmul.f32 %v530, %v530
        %v563 = vmul.f32 %v531, %v531
        %v564 = vmul.f32 %v532, %v532
        %v565 = vmul.f32 %v533, %v533
        %v566 = vmul.f32 %v534, %v534
        %v567 = vmul.f32 %v535, %v535
        %v568 = vmul.f32 %v536, %v536
        %v569 = vmul.f32 %v537, %v537
        %v570 = vmul.f32 %v538, %v538
        %v571 = vmul.f32 %v539, %v539
        %v572 = vmul.f32 %v540, %v540
        %v573 = vmul.f32 %v541, %v541
        %v574 = vmul.f32 %v542, %v542
        %v575 = vmul.f32 %v543, %v543
        %v576 = vmul.f32 %v544, %v544
        %v577 = vmul.f32 %v545, %v545
        %v578 = vmul.f32 %v546, %v546
        %v579 = vmul.f32 %v547, %v547
        %v580 = vmul.f32 %v548, %v548
        %v581 = vmul.f32 %v549, %v549
        %v582 = vmul.f32 %v550, %v550
        %v583 = vmul.f32 %v551, %v551
        %v584 = vmul.f32 %v552, %v552
        %v585 = vmul.f32 %v553, %v553
        %v586 = vmul.f32 %v554, %v554
        %v587 = vmul.f32 %v555, %v555
        %v588 = vmul.f32 %v556, %v556
        %v589 = vmul.f32 %v557, %v557
        %v590 = vmul.f32 %v558, %v558
        %v591 = vmul.f32 %v559, %v559
        %v592 = vsel %vm392, %v560, 0.0
        %593 = vadd.xlane.f32.xlu0 %v592
        %v594 = vpop.xlane.xlu0 %593
        %v595 = vsel %vm392, %v561, 0.0
        %596 = vadd.xlane.f32.xlu0 %v595
        %v597 = vpop.xlane.xlu0 %596
        %v598 = vsel %vm392, %v562, 0.0
        %599 = vadd.xlane.f32.xlu0 %v598
        %v600 = vpop.xlane.xlu0 %599
        %v601 = vsel %vm392, %v563, 0.0
        %602 = vadd.xlane.f32.xlu0 %v601
        %v603 = vpop.xlane.xlu0 %602
        %v604 = vsel %vm392, %v564, 0.0
        %605 = vadd.xlane.f32.xlu0 %v604
        %v606 = vpop.xlane.xlu0 %605
        %v607 = vsel %vm392, %v565, 0.0
        %608 = vadd.xlane.f32.xlu0 %v607
        %v609 = vpop.xlane.xlu0 %608
        %v610 = vsel %vm392, %v566, 0.0
        %611 = vadd.xlane.f32.xlu0 %v610
        %v612 = vpop.xlane.xlu0 %611
        %v613 = vsel %vm392, %v567, 0.0
        %614 = vadd.xlane.f32.xlu0 %v613
        %v615 = vpop.xlane.xlu0 %614
        %v616 = vsel %vm392, %v568, 0.0
        %617 = vadd.xlane.f32.xlu0 %v616
        %v618 = vpop.xlane.xlu0 %617
        %v619 = vsel %vm392, %v569, 0.0
        %620 = vadd.xlane.f32.xlu0 %v619
        %v621 = vpop.xlane.xlu0 %620
        %v622 = vsel %vm392, %v570, 0.0
        %623 = vadd.xlane.f32.xlu0 %v622
        %v624 = vpop.xlane.xlu0 %623
        %v625 = vsel %vm392, %v571, 0.0
        %626 = vadd.xlane.f32.xlu0 %v625
        %v627 = vpop.xlane.xlu0 %626
        %v628 = vsel %vm392, %v572, 0.0
        %629 = vadd.xlane.f32.xlu0 %v628
        %v630 = vpop.xlane.xlu0 %629
        %v631 = vsel %vm392, %v573, 0.0
        %632 = vadd.xlane.f32.xlu0 %v631
        %v633 = vpop.xlane.xlu0 %632
        %v634 = vsel %vm392, %v574, 0.0
        %635 = vadd.xlane.f32.xlu0 %v634
        %v636 = vpop.xlane.xlu0 %635
        %v637 = vsel %vm392, %v575, 0.0
        %638 = vadd.xlane.f32.xlu0 %v637
        %v639 = vpop.xlane.xlu0 %638
        %v640 = vsel %vm392, %v576, 0.0
        %641 = vadd.xlane.f32.xlu0 %v640
        %v642 = vpop.xlane.xlu0 %641
        %v643 = vsel %vm392, %v577, 0.0
        %644 = vadd.xlane.f32.xlu0 %v643
        %v645 = vpop.xlane.xlu0 %644
        %v646 = vsel %vm392, %v578, 0.0
        %647 = vadd.xlane.f32.xlu0 %v646
        %v648 = vpop.xlane.xlu0 %647
        %v649 = vsel %vm392, %v579, 0.0
        %650 = vadd.xlane.f32.xlu0 %v649
        %v651 = vpop.xlane.xlu0 %650
        %v652 = vsel %vm392, %v580, 0.0
        %653 = vadd.xlane.f32.xlu0 %v652
        %v654 = vpop.xlane.xlu0 %653
        %v655 = vsel %vm392, %v581, 0.0
        %656 = vadd.xlane.f32.xlu0 %v655
        %v657 = vpop.xlane.xlu0 %656
        %v658 = vsel %vm392, %v582, 0.0
        %659 = vadd.xlane.f32.xlu0 %v658
        %v660 = vpop.xlane.xlu0 %659
        %v661 = vsel %vm392, %v583, 0.0
        %662 = vadd.xlane.f32.xlu0 %v661
        %v663 = vpop.xlane.xlu0 %662
        %v664 = vsel %vm392, %v584, 0.0
        %665 = vadd.xlane.f32.xlu0 %v664
        %v666 = vpop.xlane.xlu0 %665
        %v667 = vsel %vm392, %v585, 0.0
        %668 = vadd.xlane.f32.xlu0 %v667
        %v669 = vpop.xlane.xlu0 %668
        %v670 = vsel %vm392, %v586, 0.0
        %671 = vadd.xlane.f32.xlu0 %v670
        %v672 = vpop.xlane.xlu0 %671
        %v673 = vsel %vm392, %v587, 0.0
        %674 = vadd.xlane.f32.xlu0 %v673
        %v675 = vpop.xlane.xlu0 %674
        %v676 = vsel %vm392, %v588, 0.0
        %677 = vadd.xlane.f32.xlu0 %v676
        %v678 = vpop.xlane.xlu0 %677
        %v679 = vsel %vm392, %v589, 0.0
        %680 = vadd.xlane.f32.xlu0 %v679
        %v681 = vpop.xlane.xlu0 %680
        %v682 = vsel %vm392, %v590, 0.0
        %683 = vadd.xlane.f32.xlu0 %v682
        %v684 = vpop.xlane.xlu0 %683
        %v685 = vsel %vm392, %v591, 0.0
        %686 = vadd.xlane.f32.xlu0 %v685
        %v687 = vpop.xlane.xlu0 %686
        %v688 = vmul.f32 %v594, %v495
        %v689 = vmul.f32 %v597, %v495
        %v690 = vmul.f32 %v600, %v495
        %v691 = vmul.f32 %v603, %v495
        %v692 = vmul.f32 %v606, %v495
        %v693 = vmul.f32 %v609, %v495
        %v694 = vmul.f32 %v612, %v495
        %v695 = vmul.f32 %v615, %v495
        %v696 = vmul.f32 %v618, %v495
        %v697 = vmul.f32 %v621, %v495
        %v698 = vmul.f32 %v624, %v495
        %v699 = vmul.f32 %v627, %v495
        %v700 = vmul.f32 %v630, %v495
        %v701 = vmul.f32 %v633, %v495
        %v702 = vmul.f32 %v636, %v495
        %v703 = vmul.f32 %v639, %v495
        %v704 = vmul.f32 %v642, %v495
        %v705 = vmul.f32 %v645, %v495
        %v706 = vmul.f32 %v648, %v495
        %v707 = vmul.f32 %v651, %v495
        %v708 = vmul.f32 %v654, %v495
        %v709 = vmul.f32 %v657, %v495
        %v710 = vmul.f32 %v660, %v495
        %v711 = vmul.f32 %v663, %v495
        %v712 = vmul.f32 %v666, %v495
        %v713 = vmul.f32 %v669, %v495
        %v714 = vmul.f32 %v672, %v495
        %v715 = vmul.f32 %v675, %v495
        %v716 = vmul.f32 %v678, %v495
        %v717 = vmul.f32 %v681, %v495
        %v718 = vmul.f32 %v684, %v495
        %v719 = vmul.f32 %v687, %v495
        %v720 = vadd.f32 %v688, 1e-05
        %v721 = vadd.f32 %v689, 1e-05
        %v722 = vadd.f32 %v690, 1e-05
        %v723 = vadd.f32 %v691, 1e-05
        %v724 = vadd.f32 %v692, 1e-05
        %v725 = vadd.f32 %v693, 1e-05
        %v726 = vadd.f32 %v694, 1e-05
        %v727 = vadd.f32 %v695, 1e-05
        %v728 = vadd.f32 %v696, 1e-05
        %v729 = vadd.f32 %v697, 1e-05
        %v730 = vadd.f32 %v698, 1e-05
        %v731 = vadd.f32 %v699, 1e-05
        %v732 = vadd.f32 %v700, 1e-05
        %v733 = vadd.f32 %v701, 1e-05
        %v734 = vadd.f32 %v702, 1e-05
        %v735 = vadd.f32 %v703, 1e-05
        %v736 = vadd.f32 %v704, 1e-05
        %v737 = vadd.f32 %v705, 1e-05
        %v738 = vadd.f32 %v706, 1e-05
        %v739 = vadd.f32 %v707, 1e-05
        %v740 = vadd.f32 %v708, 1e-05
        %v741 = vadd.f32 %v709, 1e-05
        %v742 = vadd.f32 %v710, 1e-05
        %v743 = vadd.f32 %v711, 1e-05
        %v744 = vadd.f32 %v712, 1e-05
        %v745 = vadd.f32 %v713, 1e-05
        %v746 = vadd.f32 %v714, 1e-05
        %v747 = vadd.f32 %v715, 1e-05
        %v748 = vadd.f32 %v716, 1e-05
        %v749 = vadd.f32 %v717, 1e-05
        %v750 = vadd.f32 %v718, 1e-05
        %v751 = vadd.f32 %v719, 1e-05
        %v752 = vrsqrt.pop %v720
        %v753 = vmul.f32 %v752, %v720
        %v754 = vmul.f32 %v753, %v752
        %v755 = vmul.f32 0.5, %v754
        %v756 = vsub.f32 1.5, %v755
        %v757 = vmul.f32 %v752, %v756
        %vm758 = vweird.f32 %v720
        %vm759 = vweird.f32 %v752
        %vm760 = vmor %vm758, %vm759
        %v761 = vsel %vm760, %v752, %v757
        %v762 = vrsqrt.pop %v721
        %v763 = vmul.f32 %v762, %v721
        %v764 = vmul.f32 %v763, %v762
        %v765 = vmul.f32 0.5, %v764
        %v766 = vsub.f32 1.5, %v765
        %v767 = vmul.f32 %v762, %v766
        %vm768 = vweird.f32 %v721
        %vm769 = vweird.f32 %v762
        %vm770 = vmor %vm768, %vm769
        %v771 = vsel %vm770, %v762, %v767
        %v772 = vrsqrt.pop %v722
        %v773 = vmul.f32 %v772, %v722
        %v774 = vmul.f32 %v773, %v772
        %v775 = vmul.f32 0.5, %v774
        %v776 = vsub.f32 1.5, %v775
        %v777 = vmul.f32 %v772, %v776
        %vm778 = vweird.f32 %v722
        %vm779 = vweird.f32 %v772
        %vm780 = vmor %vm778, %vm779
        %v781 = vsel %vm780, %v772, %v777
        %v782 = vrsqrt.pop %v723
        %v783 = vmul.f32 %v782, %v723
        %v784 = vmul.f32 %v783, %v782
        %v785 = vmul.f32 0.5, %v784
        %v786 = vsub.f32 1.5, %v785
        %v787 = vmul.f32 %v782, %v786
        %vm788 = vweird.f32 %v723
        %vm789 = vweird.f32 %v782
        %vm790 = vmor %vm788, %vm789
        %v791 = vsel %vm790, %v782, %v787
        %v792 = vrsqrt.pop %v724
        %v793 = vmul.f32 %v792, %v724
        %v794 = vmul.f32 %v793, %v792
        %v795 = vmul.f32 0.5, %v794
        %v796 = vsub.f32 1.5, %v795
        %v797 = vmul.f32 %v792, %v796
        %vm798 = vweird.f32 %v724
        %vm799 = vweird.f32 %v792
        %vm800 = vmor %vm798, %vm799
        %v801 = vsel %vm800, %v792, %v797
        %v802 = vrsqrt.pop %v725
        %v803 = vmul.f32 %v802, %v725
        %v804 = vmul.f32 %v803, %v802
        %v805 = vmul.f32 0.5, %v804
        %v806 = vsub.f32 1.5, %v805
        %v807 = vmul.f32 %v802, %v806
        %vm808 = vweird.f32 %v725
        %vm809 = vweird.f32 %v802
        %vm810 = vmor %vm808, %vm809
        %v811 = vsel %vm810, %v802, %v807
        %v812 = vrsqrt.pop %v726
        %v813 = vmul.f32 %v812, %v726
        %v814 = vmul.f32 %v813, %v812
        %v815 = vmul.f32 0.5, %v814
        %v816 = vsub.f32 1.5, %v815
        %v817 = vmul.f32 %v812, %v816
        %vm818 = vweird.f32 %v726
        %vm819 = vweird.f32 %v812
        %vm820 = vmor %vm818, %vm819
        %v821 = vsel %vm820, %v812, %v817
        %v822 = vrsqrt.pop %v727
        %v823 = vmul.f32 %v822, %v727
        %v824 = vmul.f32 %v823, %v822
        %v825 = vmul.f32 0.5, %v824
        %v826 = vsub.f32 1.5, %v825
        %v827 = vmul.f32 %v822, %v826
        %vm828 = vweird.f32 %v727
        %vm829 = vweird.f32 %v822
        %vm830 = vmor %vm828, %vm829
        %v831 = vsel %vm830, %v822, %v827
        %v832 = vrsqrt.pop %v728
        %v833 = vmul.f32 %v832, %v728
        %v834 = vmul.f32 %v833, %v832
        %v835 = vmul.f32 0.5, %v834
        %v836 = vsub.f32 1.5, %v835
        %v837 = vmul.f32 %v832, %v836
        %vm838 = vweird.f32 %v728
        %vm839 = vweird.f32 %v832
        %vm840 = vmor %vm838, %vm839
        %v841 = vsel %vm840, %v832, %v837
        %v842 = vrsqrt.pop %v729
        %v843 = vmul.f32 %v842, %v729
        %v844 = vmul.f32 %v843, %v842
        %v845 = vmul.f32 0.5, %v844
        %v846 = vsub.f32 1.5, %v845
        %v847 = vmul.f32 %v842, %v846
        %vm848 = vweird.f32 %v729
        %vm849 = vweird.f32 %v842
        %vm850 = vmor %vm848, %vm849
        %v851 = vsel %vm850, %v842, %v847
        %v852 = vrsqrt.pop %v730
        %v853 = vmul.f32 %v852, %v730
        %v854 = vmul.f32 %v853, %v852
        %v855 = vmul.f32 0.5, %v854
        %v856 = vsub.f32 1.5, %v855
        %v857 = vmul.f32 %v852, %v856
        %vm858 = vweird.f32 %v730
        %vm859 = vweird.f32 %v852
        %vm860 = vmor %vm858, %vm859
        %v861 = vsel %vm860, %v852, %v857
        %v862 = vrsqrt.pop %v731
        %v863 = vmul.f32 %v862, %v731
        %v864 = vmul.f32 %v863, %v862
        %v865 = vmul.f32 0.5, %v864
        %v866 = vsub.f32 1.5, %v865
        %v867 = vmul.f32 %v862, %v866
        %vm868 = vweird.f32 %v731
        %vm869 = vweird.f32 %v862
        %vm870 = vmor %vm868, %vm869
        %v871 = vsel %vm870, %v862, %v867
        %v872 = vrsqrt.pop %v732
        %v873 = vmul.f32 %v872, %v732
        %v874 = vmul.f32 %v873, %v872
        %v875 = vmul.f32 0.5, %v874
        %v876 = vsub.f32 1.5, %v875
        %v877 = vmul.f32 %v872, %v876
        %vm878 = vweird.f32 %v732
        %vm879 = vweird.f32 %v872
        %vm880 = vmor %vm878, %vm879
        %v881 = vsel %vm880, %v872, %v877
        %v882 = vrsqrt.pop %v733
        %v883 = vmul.f32 %v882, %v733
        %v884 = vmul.f32 %v883, %v882
        %v885 = vmul.f32 0.5, %v884
        %v886 = vsub.f32 1.5, %v885
        %v887 = vmul.f32 %v882, %v886
        %vm888 = vweird.f32 %v733
        %vm889 = vweird.f32 %v882
        %vm890 = vmor %vm888, %vm889
        %v891 = vsel %vm890, %v882, %v887
        %v892 = vrsqrt.pop %v734
        %v893 = vmul.f32 %v892, %v734
        %v894 = vmul.f32 %v893, %v892
        %v895 = vmul.f32 0.5, %v894
        %v896 = vsub.f32 1.5, %v895
        %v897 = vmul.f32 %v892, %v896
        %vm898 = vweird.f32 %v734
        %vm899 = vweird.f32 %v892
        %vm900 = vmor %vm898, %vm899
        %v901 = vsel %vm900, %v892, %v897
        %v902 = vrsqrt.pop %v735
        %v903 = vmul.f32 %v902, %v735
        %v904 = vmul.f32 %v903, %v902
        %v905 = vmul.f32 0.5, %v904
        %v906 = vsub.f32 1.5, %v905
        %v907 = vmul.f32 %v902, %v906
        %vm908 = vweird.f32 %v735
        %vm909 = vweird.f32 %v902
        %vm910 = vmor %vm908, %vm909
        %v911 = vsel %vm910, %v902, %v907
        %v912 = vrsqrt.pop %v736
        %v913 = vmul.f32 %v912, %v736
        %v914 = vmul.f32 %v913, %v912
        %v915 = vmul.f32 0.5, %v914
        %v916 = vsub.f32 1.5, %v915
        %v917 = vmul.f32 %v912, %v916
        %vm918 = vweird.f32 %v736
        %vm919 = vweird.f32 %v912
        %vm920 = vmor %vm918, %vm919
        %v921 = vsel %vm920, %v912, %v917
        %v922 = vrsqrt.pop %v737
        %v923 = vmul.f32 %v922, %v737
        %v924 = vmul.f32 %v923, %v922
        %v925 = vmul.f32 0.5, %v924
        %v926 = vsub.f32 1.5, %v925
        %v927 = vmul.f32 %v922, %v926
        %vm928 = vweird.f32 %v737
        %vm929 = vweird.f32 %v922
        %vm930 = vmor %vm928, %vm929
        %v931 = vsel %vm930, %v922, %v927
        %v932 = vrsqrt.pop %v738
        %v933 = vmul.f32 %v932, %v738
        %v934 = vmul.f32 %v933, %v932
        %v935 = vmul.f32 0.5, %v934
        %v936 = vsub.f32 1.5, %v935
        %v937 = vmul.f32 %v932, %v936
        %vm938 = vweird.f32 %v738
        %vm939 = vweird.f32 %v932
        %vm940 = vmor %vm938, %vm939
        %v941 = vsel %vm940, %v932, %v937
        %v942 = vrsqrt.pop %v739
        %v943 = vmul.f32 %v942, %v739
        %v944 = vmul.f32 %v943, %v942
        %v945 = vmul.f32 0.5, %v944
        %v946 = vsub.f32 1.5, %v945
        %v947 = vmul.f32 %v942, %v946
        %vm948 = vweird.f32 %v739
        %vm949 = vweird.f32 %v942
        %vm950 = vmor %vm948, %vm949
        %v951 = vsel %vm950, %v942, %v947
        %v952 = vrsqrt.pop %v740
        %v953 = vmul.f32 %v952, %v740
        %v954 = vmul.f32 %v953, %v952
        %v955 = vmul.f32 0.5, %v954
        %v956 = vsub.f32 1.5, %v955
        %v957 = vmul.f32 %v952, %v956
        %vm958 = vweird.f32 %v740
        %vm959 = vweird.f32 %v952
        %vm960 = vmor %vm958, %vm959
        %v961 = vsel %vm960, %v952, %v957
        %v962 = vrsqrt.pop %v741
        %v963 = vmul.f32 %v962, %v741
        %v964 = vmul.f32 %v963, %v962
        %v965 = vmul.f32 0.5, %v964
        %v966 = vsub.f32 1.5, %v965
        %v967 = vmul.f32 %v962, %v966
        %vm968 = vweird.f32 %v741
        %vm969 = vweird.f32 %v962
        %vm970 = vmor %vm968, %vm969
        %v971 = vsel %vm970, %v962, %v967
        %v972 = vrsqrt.pop %v742
        %v973 = vmul.f32 %v972, %v742
        %v974 = vmul.f32 %v973, %v972
        %v975 = vmul.f32 0.5, %v974
        %v976 = vsub.f32 1.5, %v975
        %v977 = vmul.f32 %v972, %v976
        %vm978 = vweird.f32 %v742
        %vm979 = vweird.f32 %v972
        %vm980 = vmor %vm978, %vm979
        %v981 = vsel %vm980, %v972, %v977
        %v982 = vrsqrt.pop %v743
        %v983 = vmul.f32 %v982, %v743
        %v984 = vmul.f32 %v983, %v982
        %v985 = vmul.f32 0.5, %v984
        %v986 = vsub.f32 1.5, %v985
        %v987 = vmul.f32 %v982, %v986
        %vm988 = vweird.f32 %v743
        %vm989 = vweird.f32 %v982
        %vm990 = vmor %vm988, %vm989
        %v991 = vsel %vm990, %v982, %v987
        %v992 = vrsqrt.pop %v744
        %v993 = vmul.f32 %v992, %v744
        %v994 = vmul.f32 %v993, %v992
        %v995 = vmul.f32 0.5, %v994
        %v996 = vsub.f32 1.5, %v995
        %v997 = vmul.f32 %v992, %v996
        %vm998 = vweird.f32 %v744
        %vm999 = vweird.f32 %v992
        %vm1000 = vmor %vm998, %vm999
        %v1001 = vsel %vm1000, %v992, %v997
        %v1002 = vrsqrt.pop %v745
        %v1003 = vmul.f32 %v1002, %v745
        %v1004 = vmul.f32 %v1003, %v1002
        %v1005 = vmul.f32 0.5, %v1004
        %v1006 = vsub.f32 1.5, %v1005
        %v1007 = vmul.f32 %v1002, %v1006
        %vm1008 = vweird.f32 %v745
        %vm1009 = vweird.f32 %v1002
        %vm1010 = vmor %vm1008, %vm1009
        %v1011 = vsel %vm1010, %v1002, %v1007
        %v1012 = vrsqrt.pop %v746
        %v1013 = vmul.f32 %v1012, %v746
        %v1014 = vmul.f32 %v1013, %v1012
        %v1015 = vmul.f32 0.5, %v1014
        %v1016 = vsub.f32 1.5, %v1015
        %v1017 = vmul.f32 %v1012, %v1016
        %vm1018 = vweird.f32 %v746
        %vm1019 = vweird.f32 %v1012
        %vm1020 = vmor %vm1018, %vm1019
        %v1021 = vsel %vm1020, %v1012, %v1017
        %v1022 = vrsqrt.pop %v747
        %v1023 = vmul.f32 %v1022, %v747
        %v1024 = vmul.f32 %v1023, %v1022
        %v1025 = vmul.f32 0.5, %v1024
        %v1026 = vsub.f32 1.5, %v1025
        %v1027 = vmul.f32 %v1022, %v1026
        %vm1028 = vweird.f32 %v747
        %vm1029 = vweird.f32 %v1022
        %vm1030 = vmor %vm1028, %vm1029
        %v1031 = vsel %vm1030, %v1022, %v1027
        %v1032 = vrsqrt.pop %v748
        %v1033 = vmul.f32 %v1032, %v748
        %v1034 = vmul.f32 %v1033, %v1032
        %v1035 = vmul.f32 0.5, %v1034
        %v1036 = vsub.f32 1.5, %v1035
        %v1037 = vmul.f32 %v1032, %v1036
        %vm1038 = vweird.f32 %v748
        %vm1039 = vweird.f32 %v1032
        %vm1040 = vmor %vm1038, %vm1039
        %v1041 = vsel %vm1040, %v1032, %v1037
        %v1042 = vrsqrt.pop %v749
        %v1043 = vmul.f32 %v1042, %v749
        %v1044 = vmul.f32 %v1043, %v1042
        %v1045 = vmul.f32 0.5, %v1044
        %v1046 = vsub.f32 1.5, %v1045
        %v1047 = vmul.f32 %v1042, %v1046
        %vm1048 = vweird.f32 %v749
        %vm1049 = vweird.f32 %v1042
        %vm1050 = vmor %vm1048, %vm1049
        %v1051 = vsel %vm1050, %v1042, %v1047
        %v1052 = vrsqrt.pop %v750
        %v1053 = vmul.f32 %v1052, %v750
        %v1054 = vmul.f32 %v1053, %v1052
        %v1055 = vmul.f32 0.5, %v1054
        %v1056 = vsub.f32 1.5, %v1055
        %v1057 = vmul.f32 %v1052, %v1056
        %vm1058 = vweird.f32 %v750
        %vm1059 = vweird.f32 %v1052
        %vm1060 = vmor %vm1058, %vm1059
        %v1061 = vsel %vm1060, %v1052, %v1057
        %v1062 = vrsqrt.pop %v751
        %v1063 = vmul.f32 %v1062, %v751
        %v1064 = vmul.f32 %v1063, %v1062
        %v1065 = vmul.f32 0.5, %v1064
        %v1066 = vsub.f32 1.5, %v1065
        %v1067 = vmul.f32 %v1062, %v1066
        %vm1068 = vweird.f32 %v751
        %vm1069 = vweird.f32 %v1062
        %vm1070 = vmor %vm1068, %vm1069
        %v1071 = vsel %vm1070, %v1062, %v1067
        %v1072 = vmul.f32 %v528, %v761
        %v1073 = vmul.f32 %v529, %v771
        %v1074 = vmul.f32 %v530, %v781
        %v1075 = vmul.f32 %v531, %v791
        %v1076 = vmul.f32 %v532, %v801
        %v1077 = vmul.f32 %v533, %v811
        %v1078 = vmul.f32 %v534, %v821
        %v1079 = vmul.f32 %v535, %v831
        %v1080 = vmul.f32 %v536, %v841
        %v1081 = vmul.f32 %v537, %v851
        %v1082 = vmul.f32 %v538, %v861
        %v1083 = vmul.f32 %v539, %v871
        %v1084 = vmul.f32 %v540, %v881
        %v1085 = vmul.f32 %v541, %v891
        %v1086 = vmul.f32 %v542, %v901
        %v1087 = vmul.f32 %v543, %v911
        %v1088 = vmul.f32 %v544, %v921
        %v1089 = vmul.f32 %v545, %v931
        %v1090 = vmul.f32 %v546, %v941
        %v1091 = vmul.f32 %v547, %v951
        %v1092 = vmul.f32 %v548, %v961
        %v1093 = vmul.f32 %v549, %v971
        %v1094 = vmul.f32 %v550, %v981
        %v1095 = vmul.f32 %v551, %v991
        %v1096 = vmul.f32 %v552, %v1001
        %v1097 = vmul.f32 %v553, %v1011
        %v1098 = vmul.f32 %v554, %v1021
        %v1099 = vmul.f32 %v555, %v1031
        %v1100 = vmul.f32 %v556, %v1041
        %v1101 = vmul.f32 %v557, %v1051
        %v1102 = vmul.f32 %v558, %v1061
        %v1103 = vmul.f32 %v559, %v1071
        %v1104 = vld [vmem:[%s2] sm:$0x1]
        %v1106 = vperm.slane %v1104, 0
        %v1108 = vmul.f32 %v1072, %v1106
        %v1109 = vmul.f32 %v1073, %v1106
        %v1110 = vmul.f32 %v1074, %v1106
        %v1111 = vmul.f32 %v1075, %v1106
        %v1112 = vmul.f32 %v1076, %v1106
        %v1113 = vmul.f32 %v1077, %v1106
        %v1114 = vmul.f32 %v1078, %v1106
        %v1115 = vmul.f32 %v1079, %v1106
        %v1116 = vmul.f32 %v1080, %v1106
        %v1117 = vmul.f32 %v1081, %v1106
        %v1118 = vmul.f32 %v1082, %v1106
        %v1119 = vmul.f32 %v1083, %v1106
        %v1120 = vmul.f32 %v1084, %v1106
        %v1121 = vmul.f32 %v1085, %v1106
        %v1122 = vmul.f32 %v1086, %v1106
        %v1123 = vmul.f32 %v1087, %v1106
        %v1124 = vmul.f32 %v1088, %v1106
        %v1125 = vmul.f32 %v1089, %v1106
        %v1126 = vmul.f32 %v1090, %v1106
        %v1127 = vmul.f32 %v1091, %v1106
        %v1128 = vmul.f32 %v1092, %v1106
        %v1129 = vmul.f32 %v1093, %v1106
        %v1130 = vmul.f32 %v1094, %v1106
        %v1131 = vmul.f32 %v1095, %v1106
        %v1132 = vmul.f32 %v1096, %v1106
        %v1133 = vmul.f32 %v1097, %v1106
        %v1134 = vmul.f32 %v1098, %v1106
        %v1135 = vmul.f32 %v1099, %v1106
        %v1136 = vmul.f32 %v1100, %v1106
        %v1137 = vmul.f32 %v1101, %v1106
        %v1138 = vmul.f32 %v1102, %v1106
        %v1139 = vmul.f32 %v1103, %v1106
        %v1140 = vld [vmem:[%s3] sm:$0x1]
        %v1142 = vperm.slane %v1140, 0
        %v1144 = vadd.f32 %v1108, %v1142
        %v1145 = vadd.f32 %v1109, %v1142
        %v1146 = vadd.f32 %v1110, %v1142
        %v1147 = vadd.f32 %v1111, %v1142
        %v1148 = vadd.f32 %v1112, %v1142
        %v1149 = vadd.f32 %v1113, %v1142
        %v1150 = vadd.f32 %v1114, %v1142
        %v1151 = vadd.f32 %v1115, %v1142
        %v1152 = vadd.f32 %v1116, %v1142
        %v1153 = vadd.f32 %v1117, %v1142
        %v1154 = vadd.f32 %v1118, %v1142
        %v1155 = vadd.f32 %v1119, %v1142
        %v1156 = vadd.f32 %v1120, %v1142
        %v1157 = vadd.f32 %v1121, %v1142
        %v1158 = vadd.f32 %v1122, %v1142
        %v1159 = vadd.f32 %v1123, %v1142
        %v1160 = vadd.f32 %v1124, %v1142
        %v1161 = vadd.f32 %v1125, %v1142
        %v1162 = vadd.f32 %v1126, %v1142
        %v1163 = vadd.f32 %v1127, %v1142
        %v1164 = vadd.f32 %v1128, %v1142
        %v1165 = vadd.f32 %v1129, %v1142
        %v1166 = vadd.f32 %v1130, %v1142
        %v1167 = vadd.f32 %v1131, %v1142
        %v1168 = vadd.f32 %v1132, %v1142
        %v1169 = vadd.f32 %v1133, %v1142
        %v1170 = vadd.f32 %v1134, %v1142
        %v1171 = vadd.f32 %v1135, %v1142
        %v1172 = vadd.f32 %v1136, %v1142
        %v1173 = vadd.f32 %v1137, %v1142
        %v1174 = vadd.f32 %v1138, %v1142
        %v1175 = vadd.f32 %v1139, %v1142
        %v1176 = vld [vmem:[%s4] sm:$0xff]
        %v1177 = vld [vmem:[%s4 + $0x8] sm:$0xff]
        %v1178 = vld [vmem:[%s4 + $0x10] sm:$0xff]
        %v1179 = vld [vmem:[%s4 + $0x18] sm:$0xff]
        %v1180 = vld [vmem:[%s5] sm:$0x1]
        %v1182 = vperm.slane %v1180, 0
        %v1185 = vsel %vm392, %v1144, 0
        %v1188 = vsel %vm392, %v1145, 0
        %v1191 = vsel %vm392, %v1146, 0
        %v1194 = vsel %vm392, %v1147, 0
        %v1197 = vsel %vm392, %v1148, 0
        %v1200 = vsel %vm392, %v1149, 0
        %v1203 = vsel %vm392, %v1150, 0
        %v1206 = vsel %vm392, %v1151, 0
        %v1209 = vsel %vm392, %v1152, 0
        %v1212 = vsel %vm392, %v1153, 0
        %v1215 = vsel %vm392, %v1154, 0
        %v1218 = vsel %vm392, %v1155, 0
        %v1221 = vsel %vm392, %v1156, 0
        %v1224 = vsel %vm392, %v1157, 0
        %v1227 = vsel %vm392, %v1158, 0
        %v1230 = vsel %vm392, %v1159, 0
        %v1233 = vsel %vm392, %v1160, 0
        %v1236 = vsel %vm392, %v1161, 0
        %v1239 = vsel %vm392, %v1162, 0
        %v1242 = vsel %vm392, %v1163, 0
        %v1245 = vsel %vm392, %v1164, 0
        %v1248 = vsel %vm392, %v1165, 0
        %v1251 = vsel %vm392, %v1166, 0
        %v1254 = vsel %vm392, %v1167, 0
        %v1257 = vsel %vm392, %v1168, 0
        %v1260 = vsel %vm392, %v1169, 0
        %v1263 = vsel %vm392, %v1170, 0
        %v1266 = vsel %vm392, %v1171, 0
        %v1269 = vsel %vm392, %v1172, 0
        %v1272 = vsel %vm392, %v1173, 0
        %v1275 = vsel %vm392, %v1174, 0
        %v1278 = vsel %vm392, %v1175, 0
        %1280 = vmatpush.msra.mxu0 0.0
        %1281 = vmatpush.msra.mxu0 0.0
        %1282 = vmatpush.msra.mxu0 0.0
        %1283 = vmatpush.msra.mxu0 0.0
        %1284 = vmatpush.msra.mxu0 0.0
        %1285 = vmatpush.msra.mxu0 0.0
        %1286 = vmatpush.msra.mxu0 0.0
        %1287 = vmatpush.msra.mxu0 0.0
        %1288 = vmatpush.msra.mxu0 0.0
        %1289 = vmatpush.msra.mxu0 0.0
        %1290 = vmatpush.msra.mxu0 0.0
        %1291 = vmatpush.msra.mxu0 0.0
        %1292 = vmatpush.msra.mxu0 %v1179
        %1293 = vmatpush.msra.mxu0 %v1178
        %1294 = vmatpush.msra.mxu0 %v1177
        %1295 = vmatpush.msra.mxu0 %v1176
        %1296 = vmatmul.f32.gmra.mxu0 %v1185
        %v1297 = vpop.f32.mrf.mxu0
        %v1298 = vadd.f32 %v1182, %v1297
        %1299 = vmatmul.f32.gmra.mxu0 %v1188
        %v1300 = vpop.f32.mrf.mxu0
        %v1301 = vadd.f32 %v1182, %v1300
        %1302 = vmatmul.f32.gmra.mxu0 %v1191
        %v1303 = vpop.f32.mrf.mxu0
        %v1304 = vadd.f32 %v1182, %v1303
        %1305 = vmatmul.f32.gmra.mxu0 %v1194
        %v1306 = vpop.f32.mrf.mxu0
        %v1307 = vadd.f32 %v1182, %v1306
        %1308 = vmatmul.f32.gmra.mxu0 %v1197
        %v1309 = vpop.f32.mrf.mxu0
        %v1310 = vadd.f32 %v1182, %v1309
        %1311 = vmatmul.f32.gmra.mxu0 %v1200
        %v1312 = vpop.f32.mrf.mxu0
        %v1313 = vadd.f32 %v1182, %v1312
        %1314 = vmatmul.f32.gmra.mxu0 %v1203
        %v1315 = vpop.f32.mrf.mxu0
        %v1316 = vadd.f32 %v1182, %v1315
        %1317 = vmatmul.f32.gmra.mxu0 %v1206
        %v1318 = vpop.f32.mrf.mxu0
        %v1319 = vadd.f32 %v1182, %v1318
        %1320 = vmatmul.f32.gmra.mxu0 %v1209
        %v1321 = vpop.f32.mrf.mxu0
        %v1322 = vadd.f32 %v1182, %v1321
        %1323 = vmatmul.f32.gmra.mxu0 %v1212
        %v1324 = vpop.f32.mrf.mxu0
        %v1325 = vadd.f32 %v1182, %v1324
        %1326 = vmatmul.f32.gmra.mxu0 %v1215
        %v1327 = vpop.f32.mrf.mxu0
        %v1328 = vadd.f32 %v1182, %v1327
        %1329 = vmatmul.f32.gmra.mxu0 %v1218
        %v1330 = vpop.f32.mrf.mxu0
        %v1331 = vadd.f32 %v1182, %v1330
        %1332 = vmatmul.f32.gmra.mxu0 %v1221
        %v1333 = vpop.f32.mrf.mxu0
        %v1334 = vadd.f32 %v1182, %v1333
        %1335 = vmatmul.f32.gmra.mxu0 %v1224
        %v1336 = vpop.f32.mrf.mxu0
        %v1337 = vadd.f32 %v1182, %v1336
        %1338 = vmatmul.f32.gmra.mxu0 %v1227
        %v1339 = vpop.f32.mrf.mxu0
        %v1340 = vadd.f32 %v1182, %v1339
        %1341 = vmatmul.f32.gmra.mxu0 %v1230
        %v1342 = vpop.f32.mrf.mxu0
        %v1343 = vadd.f32 %v1182, %v1342
        %1344 = vmatmul.f32.gmra.mxu0 %v1233
        %v1345 = vpop.f32.mrf.mxu0
        %v1346 = vadd.f32 %v1182, %v1345
        %1347 = vmatmul.f32.gmra.mxu0 %v1236
        %v1348 = vpop.f32.mrf.mxu0
        %v1349 = vadd.f32 %v1182, %v1348
        %1350 = vmatmul.f32.gmra.mxu0 %v1239
        %v1351 = vpop.f32.mrf.mxu0
        %v1352 = vadd.f32 %v1182, %v1351
        %1353 = vmatmul.f32.gmra.mxu0 %v1242
        %v1354 = vpop.f32.mrf.mxu0
        %v1355 = vadd.f32 %v1182, %v1354
        %1356 = vmatmul.f32.gmra.mxu0 %v1245
        %v1357 = vpop.f32.mrf.mxu0
        %v1358 = vadd.f32 %v1182, %v1357
        %1359 = vmatmul.f32.gmra.mxu0 %v1248
        %v1360 = vpop.f32.mrf.mxu0
        %v1361 = vadd.f32 %v1182, %v1360
        %1362 = vmatmul.f32.gmra.mxu0 %v1251
        %v1363 = vpop.f32.mrf.mxu0
        %v1364 = vadd.f32 %v1182, %v1363
        %1365 = vmatmul.f32.gmra.mxu0 %v1254
        %v1366 = vpop.f32.mrf.mxu0
        %v1367 = vadd.f32 %v1182, %v1366
        %1368 = vmatmul.f32.gmra.mxu0 %v1257
        %v1369 = vpop.f32.mrf.mxu0
        %v1370 = vadd.f32 %v1182, %v1369
        %1371 = vmatmul.f32.gmra.mxu0 %v1260
        %v1372 = vpop.f32.mrf.mxu0
        %v1373 = vadd.f32 %v1182, %v1372
        %1374 = vmatmul.f32.gmra.mxu0 %v1263
        %v1375 = vpop.f32.mrf.mxu0
        %v1376 = vadd.f32 %v1182, %v1375
        %1377 = vmatmul.f32.gmra.mxu0 %v1266
        %v1378 = vpop.f32.mrf.mxu0
        %v1379 = vadd.f32 %v1182, %v1378
        %1380 = vmatmul.f32.gmra.mxu0 %v1269
        %v1381 = vpop.f32.mrf.mxu0
        %v1382 = vadd.f32 %v1182, %v1381
        %1383 = vmatmul.f32.gmra.mxu0 %v1272
        %v1384 = vpop.f32.mrf.mxu0
        %v1385 = vadd.f32 %v1182, %v1384
        %1386 = vmatmul.f32.gmra.mxu0 %v1275
        %v1387 = vpop.f32.mrf.mxu0
        %v1388 = vadd.f32 %v1182, %v1387
        %1389 = vmatmul.f32.gmra.mxu0 %v1278
        %v1390 = vpop.f32.mrf.mxu0
        %v1391 = vadd.f32 %v1182, %v1390
        %1392 = vdwg.mxu0
        %v1393 = vmax.f32 %v1298, 0.0
        %v1394 = vmax.f32 %v1301, 0.0
        %v1395 = vmax.f32 %v1304, 0.0
        %v1396 = vmax.f32 %v1307, 0.0
        %v1397 = vmax.f32 %v1310, 0.0
        %v1398 = vmax.f32 %v1313, 0.0
        %v1399 = vmax.f32 %v1316, 0.0
        %v1400 = vmax.f32 %v1319, 0.0
        %v1401 = vmax.f32 %v1322, 0.0
        %v1402 = vmax.f32 %v1325, 0.0
        %v1403 = vmax.f32 %v1328, 0.0
        %v1404 = vmax.f32 %v1331, 0.0
        %v1405 = vmax.f32 %v1334, 0.0
        %v1406 = vmax.f32 %v1337, 0.0
        %v1407 = vmax.f32 %v1340, 0.0
        %v1408 = vmax.f32 %v1343, 0.0
        %v1409 = vmax.f32 %v1346, 0.0
        %v1410 = vmax.f32 %v1349, 0.0
        %v1411 = vmax.f32 %v1352, 0.0
        %v1412 = vmax.f32 %v1355, 0.0
        %v1413 = vmax.f32 %v1358, 0.0
        %v1414 = vmax.f32 %v1361, 0.0
        %v1415 = vmax.f32 %v1364, 0.0
        %v1416 = vmax.f32 %v1367, 0.0
        %v1417 = vmax.f32 %v1370, 0.0
        %v1418 = vmax.f32 %v1373, 0.0
        %v1419 = vmax.f32 %v1376, 0.0
        %v1420 = vmax.f32 %v1379, 0.0
        %v1421 = vmax.f32 %v1382, 0.0
        %v1422 = vmax.f32 %v1385, 0.0
        %v1423 = vmax.f32 %v1388, 0.0
        %v1424 = vmax.f32 %v1391, 0.0
        %v1425 = vld [vmem:[%s6] sm:$0xff]
        %v1426 = vld [vmem:[%s6 + $0x8] sm:$0xff]
        %v1427 = vld [vmem:[%s6 + $0x10] sm:$0xff]
        %v1428 = vld [vmem:[%s6 + $0x18] sm:$0xff]
        %v1429 = vld [vmem:[%s6 + $0x20] sm:$0xff]
        %v1430 = vld [vmem:[%s6 + $0x28] sm:$0xff]
        %v1431 = vld [vmem:[%s6 + $0x30] sm:$0xff]
        %v1432 = vld [vmem:[%s6 + $0x38] sm:$0xff]
        %v1433 = vld [vmem:[%s6 + $0x40] sm:$0xff]
        %v1434 = vld [vmem:[%s6 + $0x48] sm:$0xff]
        %v1435 = vld [vmem:[%s6 + $0x50] sm:$0xff]
        %v1436 = vld [vmem:[%s6 + $0x58] sm:$0xff]
        %v1437 = vld [vmem:[%s6 + $0x60] sm:$0xff]
        %v1438 = vld [vmem:[%s6 + $0x68] sm:$0xff]
        %v1439 = vld [vmem:[%s6 + $0x70] sm:$0xff]
        %v1440 = vld [vmem:[%s6 + $0x78] sm:$0xff]
        %v1441 = vld [vmem:[%s7] sm:$0x1]
        %v1443 = vperm.slane %v1441, 0
        %1445 = vmatpush.msra.mxu0 %v1440
        %1446 = vmatpush.msra.mxu0 %v1439
        %1447 = vmatpush.msra.mxu0 %v1438
        %1448 = vmatpush.msra.mxu0 %v1437
        %1449 = vmatpush.msra.mxu0 %v1436
        %1450 = vmatpush.msra.mxu0 %v1435
        %1451 = vmatpush.msra.mxu0 %v1434
        %1452 = vmatpush.msra.mxu0 %v1433
        %1453 = vmatpush.msra.mxu0 %v1432
        %1454 = vmatpush.msra.mxu0 %v1431
        %1455 = vmatpush.msra.mxu0 %v1430
        %1456 = vmatpush.msra.mxu0 %v1429
        %1457 = vmatpush.msra.mxu0 %v1428
        %1458 = vmatpush.msra.mxu0 %v1427
        %1459 = vmatpush.msra.mxu0 %v1426
        %1460 = vmatpush.msra.mxu0 %v1425
        %1461 = vmatmul.f32.gmra.mxu0 %v1393
        %v1462 = vpop.f32.mrf.mxu0
        %v1463 = vadd.f32 %v1443, %v1462
        %1464 = vmatmul.f32.gmra.mxu0 %v1394
        %v1465 = vpop.f32.mrf.mxu0
        %v1466 = vadd.f32 %v1443, %v1465
        %1467 = vmatmul.f32.gmra.mxu0 %v1395
        %v1468 = vpop.f32.mrf.mxu0
        %v1469 = vadd.f32 %v1443, %v1468
        %1470 = vmatmul.f32.gmra.mxu0 %v1396
        %v1471 = vpop.f32.mrf.mxu0
        %v1472 = vadd.f32 %v1443, %v1471
        %1473 = vmatmul.f32.gmra.mxu0 %v1397
        %v1474 = vpop.f32.mrf.mxu0
        %v1475 = vadd.f32 %v1443, %v1474
        %1476 = vmatmul.f32.gmra.mxu0 %v1398
        %v1477 = vpop.f32.mrf.mxu0
        %v1478 = vadd.f32 %v1443, %v1477
        %1479 = vmatmul.f32.gmra.mxu0 %v1399
        %v1480 = vpop.f32.mrf.mxu0
        %v1481 = vadd.f32 %v1443, %v1480
        %1482 = vmatmul.f32.gmra.mxu0 %v1400
        %v1483 = vpop.f32.mrf.mxu0
        %v1484 = vadd.f32 %v1443, %v1483
        %1485 = vmatmul.f32.gmra.mxu0 %v1401
        %v1486 = vpop.f32.mrf.mxu0
        %v1487 = vadd.f32 %v1443, %v1486
        %1488 = vmatmul.f32.gmra.mxu0 %v1402
        %v1489 = vpop.f32.mrf.mxu0
        %v1490 = vadd.f32 %v1443, %v1489
        %1491 = vmatmul.f32.gmra.mxu0 %v1403
        %v1492 = vpop.f32.mrf.mxu0
        %v1493 = vadd.f32 %v1443, %v1492
        %1494 = vmatmul.f32.gmra.mxu0 %v1404
        %v1495 = vpop.f32.mrf.mxu0
        %v1496 = vadd.f32 %v1443, %v1495
        %1497 = vmatmul.f32.gmra.mxu0 %v1405
        %v1498 = vpop.f32.mrf.mxu0
        %v1499 = vadd.f32 %v1443, %v1498
        %1500 = vmatmul.f32.gmra.mxu0 %v1406
        %v1501 = vpop.f32.mrf.mxu0
        %v1502 = vadd.f32 %v1443, %v1501
        %1503 = vmatmul.f32.gmra.mxu0 %v1407
        %v1504 = vpop.f32.mrf.mxu0
        %v1505 = vadd.f32 %v1443, %v1504
        %1506 = vmatmul.f32.gmra.mxu0 %v1408
        %v1507 = vpop.f32.mrf.mxu0
        %v1508 = vadd.f32 %v1443, %v1507
        %1509 = vmatmul.f32.gmra.mxu0 %v1409
        %v1510 = vpop.f32.mrf.mxu0
        %v1511 = vadd.f32 %v1443, %v1510
        %1512 = vmatmul.f32.gmra.mxu0 %v1410
        %v1513 = vpop.f32.mrf.mxu0
        %v1514 = vadd.f32 %v1443, %v1513
        %1515 = vmatmul.f32.gmra.mxu0 %v1411
        %v1516 = vpop.f32.mrf.mxu0
        %v1517 = vadd.f32 %v1443, %v1516
        %1518 = vmatmul.f32.gmra.mxu0 %v1412
        %v1519 = vpop.f32.mrf.mxu0
        %v1520 = vadd.f32 %v1443, %v1519
        %1521 = vmatmul.f32.gmra.mxu0 %v1413
        %v1522 = vpop.f32.mrf.mxu0
        %v1523 = vadd.f32 %v1443, %v1522
        %1524 = vmatmul.f32.gmra.mxu0 %v1414
        %v1525 = vpop.f32.mrf.mxu0
        %v1526 = vadd.f32 %v1443, %v1525
        %1527 = vmatmul.f32.gmra.mxu0 %v1415
        %v1528 = vpop.f32.mrf.mxu0
        %v1529 = vadd.f32 %v1443, %v1528
        %1530 = vmatmul.f32.gmra.mxu0 %v1416
        %v1531 = vpop.f32.mrf.mxu0
        %v1532 = vadd.f32 %v1443, %v1531
        %1533 = vmatmul.f32.gmra.mxu0 %v1417
        %v1534 = vpop.f32.mrf.mxu0
        %v1535 = vadd.f32 %v1443, %v1534
        %1536 = vmatmul.f32.gmra.mxu0 %v1418
        %v1537 = vpop.f32.mrf.mxu0
        %v1538 = vadd.f32 %v1443, %v1537
        %1539 = vmatmul.f32.gmra.mxu0 %v1419
        %v1540 = vpop.f32.mrf.mxu0
        %v1541 = vadd.f32 %v1443, %v1540
        %1542 = vmatmul.f32.gmra.mxu0 %v1420
        %v1543 = vpop.f32.mrf.mxu0
        %v1544 = vadd.f32 %v1443, %v1543
        %1545 = vmatmul.f32.gmra.mxu0 %v1421
        %v1546 = vpop.f32.mrf.mxu0
        %v1547 = vadd.f32 %v1443, %v1546
        %1548 = vmatmul.f32.gmra.mxu0 %v1422
        %v1549 = vpop.f32.mrf.mxu0
        %v1550 = vadd.f32 %v1443, %v1549
        %1551 = vmatmul.f32.gmra.mxu0 %v1423
        %v1552 = vpop.f32.mrf.mxu0
        %v1553 = vadd.f32 %v1443, %v1552
        %1554 = vmatmul.f32.gmra.mxu0 %v1424
        %v1555 = vpop.f32.mrf.mxu0
        %v1556 = vadd.f32 %v1443, %v1555
        %1557 = vdwg.mxu0
        %v1558 = vld [vmem:[%s358] sm:$0x1]
        %v1560 = vperm.slane %v1558, 0
        %v1562 = vmul.f32 %v1144, %v1560
        %v1563 = vmul.f32 %v1145, %v1560
        %v1564 = vmul.f32 %v1146, %v1560
        %v1565 = vmul.f32 %v1147, %v1560
        %v1566 = vmul.f32 %v1148, %v1560
        %v1567 = vmul.f32 %v1149, %v1560
        %v1568 = vmul.f32 %v1150, %v1560
        %v1569 = vmul.f32 %v1151, %v1560
        %v1570 = vmul.f32 %v1152, %v1560
        %v1571 = vmul.f32 %v1153, %v1560
        %v1572 = vmul.f32 %v1154, %v1560
        %v1573 = vmul.f32 %v1155, %v1560
        %v1574 = vmul.f32 %v1156, %v1560
        %v1575 = vmul.f32 %v1157, %v1560
        %v1576 = vmul.f32 %v1158, %v1560
        %v1577 = vmul.f32 %v1159, %v1560
        %v1578 = vmul.f32 %v1160, %v1560
        %v1579 = vmul.f32 %v1161, %v1560
        %v1580 = vmul.f32 %v1162, %v1560
        %v1581 = vmul.f32 %v1163, %v1560
        %v1582 = vmul.f32 %v1164, %v1560
        %v1583 = vmul.f32 %v1165, %v1560
        %v1584 = vmul.f32 %v1166, %v1560
        %v1585 = vmul.f32 %v1167, %v1560
        %v1586 = vmul.f32 %v1168, %v1560
        %v1587 = vmul.f32 %v1169, %v1560
        %v1588 = vmul.f32 %v1170, %v1560
        %v1589 = vmul.f32 %v1171, %v1560
        %v1590 = vmul.f32 %v1172, %v1560
        %v1591 = vmul.f32 %v1173, %v1560
        %v1592 = vmul.f32 %v1174, %v1560
        %v1593 = vmul.f32 %v1175, %v1560
        %v1594 = vadd.f32 %v1562, %v1463
        %v1595 = vadd.f32 %v1563, %v1466
        %v1596 = vadd.f32 %v1564, %v1469
        %v1597 = vadd.f32 %v1565, %v1472
        %v1598 = vadd.f32 %v1566, %v1475
        %v1599 = vadd.f32 %v1567, %v1478
        %v1600 = vadd.f32 %v1568, %v1481
        %v1601 = vadd.f32 %v1569, %v1484
        %v1602 = vadd.f32 %v1570, %v1487
        %v1603 = vadd.f32 %v1571, %v1490
        %v1604 = vadd.f32 %v1572, %v1493
        %v1605 = vadd.f32 %v1573, %v1496
        %v1606 = vadd.f32 %v1574, %v1499
        %v1607 = vadd.f32 %v1575, %v1502
        %v1608 = vadd.f32 %v1576, %v1505
        %v1609 = vadd.f32 %v1577, %v1508
        %v1610 = vadd.f32 %v1578, %v1511
        %v1611 = vadd.f32 %v1579, %v1514
        %v1612 = vadd.f32 %v1580, %v1517
        %v1613 = vadd.f32 %v1581, %v1520
        %v1614 = vadd.f32 %v1582, %v1523
        %v1615 = vadd.f32 %v1583, %v1526
        %v1616 = vadd.f32 %v1584, %v1529
        %v1617 = vadd.f32 %v1585, %v1532
        %v1618 = vadd.f32 %v1586, %v1535
        %v1619 = vadd.f32 %v1587, %v1538
        %v1620 = vadd.f32 %v1588, %v1541
        %v1621 = vadd.f32 %v1589, %v1544
        %v1622 = vadd.f32 %v1590, %v1547
        %v1623 = vadd.f32 %v1591, %v1550
        %v1624 = vadd.f32 %v1592, %v1553
        %v1625 = vadd.f32 %v1593, %v1556
        %v1626 = vadd.f32 %v1594, %v360
        %v1627 = vadd.f32 %v1595, %v361
        %v1628 = vadd.f32 %v1596, %v362
        %v1629 = vadd.f32 %v1597, %v363
        %v1630 = vadd.f32 %v1598, %v364
        %v1631 = vadd.f32 %v1599, %v365
        %v1632 = vadd.f32 %v1600, %v366
        %v1633 = vadd.f32 %v1601, %v367
        %v1634 = vadd.f32 %v1602, %v368
        %v1635 = vadd.f32 %v1603, %v369
        %v1636 = vadd.f32 %v1604, %v370
        %v1637 = vadd.f32 %v1605, %v371
        %v1638 = vadd.f32 %v1606, %v372
        %v1639 = vadd.f32 %v1607, %v373
        %v1640 = vadd.f32 %v1608, %v374
        %v1641 = vadd.f32 %v1609, %v375
        %v1642 = vadd.f32 %v1610, %v376
        %v1643 = vadd.f32 %v1611, %v377
        %v1644 = vadd.f32 %v1612, %v378
        %v1645 = vadd.f32 %v1613, %v379
        %v1646 = vadd.f32 %v1614, %v380
        %v1647 = vadd.f32 %v1615, %v381
        %v1648 = vadd.f32 %v1616, %v382
        %v1649 = vadd.f32 %v1617, %v383
        %v1650 = vadd.f32 %v1618, %v384
        %v1651 = vadd.f32 %v1619, %v385
        %v1652 = vadd.f32 %v1620, %v386
        %v1653 = vadd.f32 %v1621, %v387
        %v1654 = vadd.f32 %v1622, %v388
        %v1655 = vadd.f32 %v1623, %v389
        %v1656 = vadd.f32 %v1624, %v390
        %v1657 = vadd.f32 %v1625, %v391
        %1658 = vst.msk [vmem:[%s354] sm:$0xff] %vm392, %v1626
        %1659 = vst.msk [vmem:[%s354 + $0x8] sm:$0xff] %vm392, %v1627
        %1660 = vst.msk [vmem:[%s354 + $0x10] sm:$0xff] %vm392, %v1628
        %1661 = vst.msk [vmem:[%s354 + $0x18] sm:$0xff] %vm392, %v1629
        %1662 = vst.msk [vmem:[%s354 + $0x20] sm:$0xff] %vm392, %v1630
        %1663 = vst.msk [vmem:[%s354 + $0x28] sm:$0xff] %vm392, %v1631
        %1664 = vst.msk [vmem:[%s354 + $0x30] sm:$0xff] %vm392, %v1632
        %1665 = vst.msk [vmem:[%s354 + $0x38] sm:$0xff] %vm392, %v1633
        %1666 = vst.msk [vmem:[%s354 + $0x40] sm:$0xff] %vm392, %v1634
        %1667 = vst.msk [vmem:[%s354 + $0x48] sm:$0xff] %vm392, %v1635
        %1668 = vst.msk [vmem:[%s354 + $0x50] sm:$0xff] %vm392, %v1636
        %1669 = vst.msk [vmem:[%s354 + $0x58] sm:$0xff] %vm392, %v1637
        %1670 = vst.msk [vmem:[%s354 + $0x60] sm:$0xff] %vm392, %v1638
        %1671 = vst.msk [vmem:[%s354 + $0x68] sm:$0xff] %vm392, %v1639
        %1672 = vst.msk [vmem:[%s354 + $0x70] sm:$0xff] %vm392, %v1640
        %1673 = vst.msk [vmem:[%s354 + $0x78] sm:$0xff] %vm392, %v1641
        %1674 = vst.msk [vmem:[%s354 + $0x80] sm:$0xff] %vm392, %v1642
        %1675 = vst.msk [vmem:[%s354 + $0x88] sm:$0xff] %vm392, %v1643
        %1676 = vst.msk [vmem:[%s354 + $0x90] sm:$0xff] %vm392, %v1644
        %1677 = vst.msk [vmem:[%s354 + $0x98] sm:$0xff] %vm392, %v1645
        %1678 = vst.msk [vmem:[%s354 + $0xa0] sm:$0xff] %vm392, %v1646
        %1679 = vst.msk [vmem:[%s354 + $0xa8] sm:$0xff] %vm392, %v1647
        %1680 = vst.msk [vmem:[%s354 + $0xb0] sm:$0xff] %vm392, %v1648
        %1681 = vst.msk [vmem:[%s354 + $0xb8] sm:$0xff] %vm392, %v1649
        %1682 = vst.msk [vmem:[%s354 + $0xc0] sm:$0xff] %vm392, %v1650
        %1683 = vst.msk [vmem:[%s354 + $0xc8] sm:$0xff] %vm392, %v1651
        %1684 = vst.msk [vmem:[%s354 + $0xd0] sm:$0xff] %vm392, %v1652
        %1685 = vst.msk [vmem:[%s354 + $0xd8] sm:$0xff] %vm392, %v1653
        %1686 = vst.msk [vmem:[%s354 + $0xe0] sm:$0xff] %vm392, %v1654
        %1687 = vst.msk [vmem:[%s354 + $0xe8] sm:$0xff] %vm392, %v1655
        %1688 = vst.msk [vmem:[%s354 + $0xf0] sm:$0xff] %vm392, %v1656
        %1689 = vst.msk [vmem:[%s354 + $0xf8] sm:$0xff] %vm392, %v1657
        %s1690 = sand.u32 %s227, 1
        %s1691 = scalar_lea.sflag [#allocation4], %s1690
        %s1692 = sand.u32 %s227, 1
        %s1693 = smul.addr %s1692, 256
        %s1694 = scalar_lea.vmem [#allocation5], %s1693
        // Predicated region
        $region57: #{se_adapter.3} parent=51 // pred_check
          %p1695 = pneg %p237
        $region58: #{se_adapter.3} parent=51 // pred_check_branch
          %1697 = sbr.rel (%p1695) target = $region60
        $region59: #{se_adapter.3} parent=51 // pred_region
          %s1698 = smul.u32 32, %s30
          %1700 = vsyncadd %s1691, 0
          %s1701 = smul.addr %s29, 32
          %s1702 = sadd.s32 %s1698, %s1701
          %s1703 = smul.addr %s1702, 8
          %s1704 = scalar_lea.hbm %s8, %s1703
          %s1705 = sshll.u32 %s1694, 4
          %s1706 = int_to_ptr.vmem [resolvable:$true] %s1705
          %s1707 = sshll.u32 %s1704, 4
          %s1708 = int_to_ptr.hbm [resolvable:$true] %s1707
          %1713 = dma.vmem_to_hbm [thread:$0]  %s1706, 4096, %s1708, %s1691, 128, 128, 8
        $region60: #{se_adapter.3} parent=51 // pred_fallthru
          _
      $region52: #{se_adapter.3} parent=5 // pred_fallthru
        _
      %p1714 = scmp.le.s32.totalorder 2, %s20
      // Predicated region
      $region61: #{se_adapter.3} parent=5 // pred_check
        %p1715 = pneg %p1714
      $region62: #{se_adapter.3} parent=5 // pred_check_branch
        %1717 = sbr.rel (%p1715) target = $region64
      $region63: #{se_adapter.3} parent=5 // pred_region
        %s1718 = ssub.s32 %s20, 2
        // Predicated region
        $region65: #{se_adapter.3} parent=63 // pred_check
          %p1719 = pneg %p243
        $region66: #{se_adapter.3} parent=63 // pred_check_branch
          %1721 = sbr.rel (%p1719) target = $region68
        $region67: #{se_adapter.3} parent=63 // pred_region
          %s1722 = sand.u32 %s228, 1
          %s1723 = scalar_lea.sflag [#allocation4], %s1722
          %s1724 = sand.u32 %s228, 1
          %s1725 = smul.addr %s1724, 256
          %s1726 = scalar_lea.vmem [#allocation5], %s1725
          %1728 = dma.done %s1723, 4096
        $region68: #{se_adapter.3} parent=63 // pred_fallthru
          _
      $region64: #{se_adapter.3} parent=5 // pred_fallthru
        _
    $region6: #{se_adapter.3} parent=1 // loop_footer
      %s24 = sadd.s32 1, %s20
    $region7: #{se_adapter.3} parent=1 // loop_footer_branch
      %19 = sbr.rel target = $region3
    $region8: #{se_adapter.3} parent=1 // loop_exit
      _
    %1729 = vsyncpa [#allocation3], 1
    %s1730 = scalar_lea.sflag [#allocation3], 1
    %1731 = vsyncpa %s1730, 1
    %1732 = vsyncpa [#allocation4], 1
    %s1733 = scalar_lea.sflag [#allocation4], 1
    %1734 = vsyncpa %s1733, 1

</llo_original>
